<compile_context>
chip_gen: v5e
topology: v5e:2x2
jax: 0.10.0
libtpu: 0.0.40
codegen_flags: <defaults>
</compile_context>

<pallas_src>
import jax
import jax.numpy as jnp
import numpy as np
from jax import lax
from jax.experimental import pallas as pl
from jax.experimental.pallas import tpu as pltpu

LANE = 128  # TPU lane width; channel dims are padded up to a multiple of this


def _round_up(n, m):
    return ((n + m - 1) // m) * m


# -----------------------------------------------------------------------------
# Pallas kernel factory: fused DoubleConv on one (batch, row-tile) slab (NHWC,
# channel-padded).  H (true height) and TH (row tile) are baked in statically.
# -----------------------------------------------------------------------------
def _make_double_conv_kernel(H, TH):
    def kernel(x_ref, w1_ref, w2_ref, out_ref):
        # x_ref  : (1, 1, TH+4, W, Cin_p)  bf16  halo'd input slab (2 rows each side,
        #                                        zero rows at global boundaries)
        # w1_ref : (3, 3*Cin_p, Cmid_p)    bf16  conv1 weights [dy, dx*Cin_p+ci, co]
        # w2_ref : (3, 3*Cmid_p, Cout_p)   bf16  conv2 weights [dy, dx*Cmid_p+ci, co]
        # out_ref: (1, TH, W, Cout_p)      bf16
        W = out_ref.shape[2]
        cin_p = x_ref.shape[4]
        cmid_p = w1_ref.shape[2]
        cout_p = out_ref.shape[3]
        r = pl.program_id(1)
        TM = TH + 2  # mid rows needed by this tile (1-row halo for conv2)

        x = x_ref[0, 0]  # (TH+4, W, Cin_p)

        def shifted_cat(a):
            # a: (rows, W, C) -> (rows, W, 3C) = [a[:, w-1] | a[:, w] | a[:, w+1]],
            # with zero columns standing in for the conv's W zero-padding.  The
            # channel-axis concat is lane-aligned (C is a multiple of 128).
            rows, _, c = a.shape
            zcol = jnp.zeros((rows, 1, c), a.dtype)
            am1 = jnp.concatenate([zcol, a[:, : W - 1, :]], axis=1)   # tap dx=0
            ap1 = jnp.concatenate([a[:, 1:, :], zcol], axis=1)        # tap dx=2
            return jnp.concatenate([am1, a, ap1], axis=-1)

        # ---- conv1 + ReLU: 3 matmuls (one per dy), K = 3*Cin_p, f32 accumulate ----
        xcat = shifted_cat(x)                              # (TH+4, W, 3*Cin_p)
        acc1 = jnp.zeros((TM * W, cmid_p), jnp.float32)
        for dy in range(3):
            a2d = xcat[dy:dy + TM].reshape(TM * W, 3 * cin_p)
            acc1 = acc1 + jnp.dot(a2d, w1_ref[dy], preferred_element_type=jnp.float32)
        mid = jnp.maximum(acc1, 0.0).reshape(TM, W, cmid_p)

        # conv2's row zero-padding: zero mid rows whose GLOBAL index is outside [0, H)
        m_global = lax.broadcasted_iota(jnp.int32, (TM, 1, 1), 0) + (r * TH - 1)
        mid = jnp.where((m_global >= 0) & (m_global < H), mid, 0.0)
        mid = mid.astype(jnp.bfloat16)

        # ---- conv2 + ReLU: same structure, K = 3*Cmid_p ----
        mcat = shifted_cat(mid)                            # (TM, W, 3*Cmid_p)
        acc2 = jnp.zeros((TH * W, cout_p), jnp.float32)
        for dy in range(3):
            a2d = mcat[dy:dy + TH].reshape(TH * W, 3 * cmid_p)
            acc2 = acc2 + jnp.dot(a2d, w2_ref[dy], preferred_element_type=jnp.float32)
        out_ref[...] = jnp.maximum(acc2, 0.0).reshape(1, TH, W, cout_p).astype(out_ref.dtype)

    return kernel


# -----------------------------------------------------------------------------
# Wrapper: NCHW in/out, channel padding, halo'd row slabs, dy-grouped weights.
# -----------------------------------------------------------------------------
def double_conv_pallas(x_nchw, w1_hwio, w2_hwio, row_tile=8):
    """x_nchw: (N, Cin, H, W) f32; w*: HWIO f32 (3,3,ci,co). Returns (N, Cout, H, W) f32."""
    N, Cin, H, W = x_nchw.shape
    Cmid = w1_hwio.shape[3]
    Cout = w2_hwio.shape[3]
    cin_p = _round_up(Cin, LANE)
    cmid_p = _round_up(Cmid, LANE)
    cout_p = _round_up(Cout, LANE)

    TH = min(row_tile, H)
    R = -(-H // TH)          # number of row tiles
    Hp = R * TH              # H padded up to a multiple of TH (extra rows discarded)

    # NCHW -> NHWC, bf16 compute dtype; 2-row halo pad top/bottom (+ tiling pad),
    # channel pad to a lane multiple.  W is NOT padded (columns handled in-kernel).
    x = jnp.transpose(x_nchw, (0, 2, 3, 1)).astype(jnp.bfloat16)
    xp = jnp.pad(x, ((0, 0), (2, 2 + Hp - H), (0, 0), (0, cin_p - Cin)))
    # Halo'd row slabs: slab r covers padded rows [r*TH, r*TH + TH + 4).
    slabs = jnp.stack([xp[:, r * TH: r * TH + TH + 4] for r in range(R)], axis=1)
    # slabs: (N, R, TH+4, W, cin_p)

    # Weights: HWIO -> [dy, dx*C+ci, co] (dx taps folded into the contraction dim).
    w1p = jnp.pad(w1_hwio, ((0, 0), (0, 0), (0, cin_p - Cin), (0, cmid_p - Cmid)))
    w2p = jnp.pad(w2_hwio, ((0, 0), (0, 0), (0, cmid_p - Cmid), (0, cout_p - Cout)))
    w1m = w1p.reshape(3, 3 * cin_p, cmid_p).astype(jnp.bfloat16)
    w2m = w2p.reshape(3, 3 * cmid_p, cout_p).astype(jnp.bfloat16)

    flops = 2 * N * R * ((TH + 2) * W * 9 * cin_p * cmid_p + TH * W * 9 * cmid_p * cout_p)
    bytes_accessed = (
        N * R * (TH + 4) * W * cin_p * 2
        + (9 * cin_p * cmid_p + 9 * cmid_p * cout_p) * 2
        + N * Hp * W * cout_p * 2
    )

    out_nhwc = pl.pallas_call(
        _make_double_conv_kernel(H, TH),
        out_shape=jax.ShapeDtypeStruct((N, Hp, W, cout_p), jnp.bfloat16),
        grid_spec=pltpu.PrefetchScalarGridSpec(
            num_scalar_prefetch=0,
            grid=(N, R),
            in_specs=[
                pl.BlockSpec((1, 1, TH + 4, W, cin_p), lambda n, r: (n, r, 0, 0, 0)),
                pl.BlockSpec((3, 3 * cin_p, cmid_p), lambda n, r: (0, 0, 0)),
                pl.BlockSpec((3, 3 * cmid_p, cout_p), lambda n, r: (0, 0, 0)),
            ],
            out_specs=pl.BlockSpec((1, TH, W, cout_p), lambda n, r: (n, r, 0, 0)),
        ),
        compiler_params=pltpu.CompilerParams(
            dimension_semantics=("parallel", "parallel"),
            vmem_limit_bytes=48 * 1024 * 1024,
        ),
        cost_estimate=pl.CostEstimate(
            flops=flops, transcendentals=0, bytes_accessed=bytes_accessed
        ),
    )(slabs, w1m, w2m)

    out_nhwc = out_nhwc[:, :H, :, :Cout]                    # drop row/channel padding
    return jnp.transpose(out_nhwc, (0, 3, 1, 2)).astype(jnp.float32)  # NHWC -> NCHW


# -----------------------------------------------------------------------------
# JAX glue for the Up module: bilinear x2 upsample (align_corners=True), pad, concat.
# -----------------------------------------------------------------------------
def _bilinear_upsample_2x_align_corners(x):
    """x: (N, C, H, W) -> (N, C, 2H, 2W); matches nn.Upsample(scale_factor=2,
    mode='bilinear', align_corners=True)."""
    N, C, H, W = x.shape

    def coords(s_in):
        s_out = 2 * s_in
        if s_in == 1:
            z = jnp.zeros((s_out,), jnp.int32)
            return z, z, jnp.zeros((s_out,), x.dtype)
        src = jnp.arange(s_out, dtype=jnp.float32) * (s_in - 1) / (s_out - 1)
        i0 = jnp.clip(jnp.floor(src).astype(jnp.int32), 0, s_in - 2)
        w = (src - i0.astype(jnp.float32)).astype(x.dtype)
        return i0, i0 + 1, w

    h0, h1, wh = coords(H)
    w0, w1, ww = coords(W)
    xh = (x[:, :, h0, :] * (1.0 - wh)[None, None, :, None]
          + x[:, :, h1, :] * wh[None, None, :, None])
    out = (xh[:, :, :, w0] * (1.0 - ww)[None, None, None, :]
           + xh[:, :, :, w1] * ww[None, None, None, :])
    return out


def _upsample_pad_concat(x1, x2):
    x1u = _bilinear_upsample_2x_align_corners(x1)
    diffY = x2.shape[2] - x1u.shape[2]
    diffX = x2.shape[3] - x1u.shape[3]
    x1u = jnp.pad(
        x1u,
        ((0, 0), (0, 0),
         (diffY // 2, diffY - diffY // 2),
         (diffX // 2, diffX - diffX // 2)),
    )
    return jnp.concatenate([x2, x1u], axis=1)   # torch.cat([x2, x1], dim=1)


def up_forward(x1, x2, w1_hwio, w2_hwio):
    """Up.forward: upsample x1, pad to x2's size, concat, DoubleConv (Pallas)."""
    x = _upsample_pad_concat(x1, x2)
    return double_conv_pallas(x, w1_hwio, w2_hwio)


# -----------------------------------------------------------------------------
# Pure-JAX reference with the SAME bf16 input quantization / f32 accumulation.
# -----------------------------------------------------------------------------
def _double_conv_reference(x_nchw, w1_hwio, w2_hwio):
    dn = ("NCHW", "OIHW", "NCHW")
    w1_oihw = jnp.transpose(w1_hwio, (3, 2, 0, 1)).astype(jnp.bfloat16)
    w2_oihw = jnp.transpose(w2_hwio, (3, 2, 0, 1)).astype(jnp.bfloat16)
    y = lax.conv_general_dilated(
        x_nchw.astype(jnp.bfloat16), w1_oihw, (1, 1), ((1, 1), (1, 1)),
        dimension_numbers=dn, preferred_element_type=jnp.float32)
    y = jnp.maximum(y, 0.0)
    y = lax.conv_general_dilated(
        y.astype(jnp.bfloat16), w2_oihw, (1, 1), ((1, 1), (1, 1)),
        dimension_numbers=dn, preferred_element_type=jnp.float32)
    return jnp.maximum(y, 0.0)


def up_forward_reference(x1, x2, w1_hwio, w2_hwio):
    x = _upsample_pad_concat(x1, x2)
    return _double_conv_reference(x, w1_hwio, w2_hwio)


if __name__ == "__main__":
    # Up(in_channels=16, out_channels=8, bilinear=True):
    #   x1: (N, 8, 8, 8)   -> upsampled to 16x16
    #   x2: (N, 8, 16, 16)
    #   concat -> 16 channels; DoubleConv(16, 8, mid=8)
    N = 2
    in_channels, out_channels = 16, 8
    mid_channels = in_channels // 2
    H1 = W1 = 8

    key = jax.random.PRNGKey(0)
    k1, k2, k3, kw1, kw2 = jax.random.split(key, 5)
    x1 = jax.random.normal(k1, (N, in_channels // 2, H1, W1), dtype=jnp.float32)
    x2 = jax.random.normal(k2, (N, in_channels // 2, 2 * H1, 2 * W1), dtype=jnp.float32)
    # HWIO weights (bias=False), kaiming-ish scale
    w1 = jax.random.normal(kw1, (3, 3, in_channels, mid_channels), dtype=jnp.float32) * 0.2
    w2 = jax.random.normal(kw2, (3, 3, mid_channels, out_channels), dtype=jnp.float32) * 0.2

    jit_up = jax.jit(up_forward)
    jit_ref = jax.jit(up_forward_reference)

    out = jax.block_until_ready(jit_up(x1, x2, w1, w2))
    ref = jax.block_until_ready(jit_ref(x1, x2, w1, w2))
    assert out.shape == (N, out_channels, 2 * H1, 2 * W1)
    # Kernel writes bf16; round the f32 reference through bf16 so the only remaining
    # deltas are f32-accumulation-order effects (well inside 1e-2).
    ref_b = np.asarray(ref.astype(jnp.bfloat16).astype(jnp.float32))
    np.testing.assert_allclose(np.asarray(out), ref_b, rtol=1e-2, atol=1e-2)

    # Second case exercises asymmetric F.pad, a non-multiple-of-tile height (H=17)
    # and the row-masking path at the bottom boundary.
    x1b = jax.random.normal(k3, (1, in_channels // 2, H1, W1), dtype=jnp.float32)
    x2b = jax.random.normal(k2, (1, in_channels // 2, 17, 16), dtype=jnp.float32)
    outb = jax.block_until_ready(jit_up(x1b, x2b, w1, w2))
    refb = jax.block_until_ready(jit_ref(x1b, x2b, w1, w2))
    assert outb.shape == (1, out_channels, 17, 16)
    refb_b = np.asarray(refb.astype(jnp.bfloat16).astype(jnp.float32))
    np.testing.assert_allclose(np.asarray(outb), refb_b, rtol=1e-2, atol=1e-2)

    print("KERNEL_OK")
</pallas_src>

<mosaic_0001>
module attributes {stable_mosaic.version = 11 : i64} {
  func.func @kernel(%arg0: i32, %arg1: i32, %arg2: memref<1x1x12x16x128xbf16, #tpu.memory_space<vmem>>, %arg3: memref<3x384x128xbf16, #tpu.memory_space<vmem>>, %arg4: memref<3x384x128xbf16, #tpu.memory_space<vmem>>, %arg5: memref<1x8x16x128xbf16, #tpu.memory_space<vmem>>) attributes {dimension_semantics = [#tpu.dimension_semantics<parallel>, #tpu.dimension_semantics<parallel>], iteration_bounds = array<i64: 2, 2>, scalar_prefetch = 0 : i64, scratch_operands = 0 : i64, tpu.core_type = #tpu.core_type<tc>, window_params = [{transform_indices = @transform_0, window_bounds = array<i64: 1, 1, 12, 16, 128>}, {pipeline_mode = #tpu.pipeline_mode<synchronous>, transform_indices = @transform_1, window_bounds = array<i64: 3, 384, 128>}, {pipeline_mode = #tpu.pipeline_mode<synchronous>, transform_indices = @transform_2, window_bounds = array<i64: 3, 384, 128>}, {transform_indices = @transform_3, window_bounds = array<i64: 1, 8, 16, 128>}]} {
    %c0 = arith.constant 0 : index
    %c0_0 = arith.constant 0 : index
    %c0_1 = arith.constant 0 : index
    %c0_2 = arith.constant 0 : index
    %c0_3 = arith.constant 0 : index
    %0 = vector.load %arg2[%c0, %c0_0, %c0_1, %c0_2, %c0_3] : memref<1x1x12x16x128xbf16, #tpu.memory_space<vmem>>, vector<1x1x12x16x128xbf16>
    %1 = vector.shape_cast %0 : vector<1x1x12x16x128xbf16> to vector<12x16x128xbf16>
    %cst = arith.constant 0.000000e+00 : bf16
    %2 = vector.broadcast %cst : bf16 to vector<12x1x128xbf16>
    %3 = vector.extract_strided_slice %1 {offsets = [0, 0, 0], sizes = [12, 15, 128], strides = [1, 1, 1]} : vector<12x16x128xbf16> to vector<12x15x128xbf16>
    %4 = tpu.concatenate %2, %3 in 1 : vector<12x1x128xbf16>, vector<12x15x128xbf16> -> vector<12x16x128xbf16>
    %5 = vector.extract_strided_slice %1 {offsets = [0, 1, 0], sizes = [12, 15, 128], strides = [1, 1, 1]} : vector<12x16x128xbf16> to vector<12x15x128xbf16>
    %6 = tpu.concatenate %5, %2 in 1 : vector<12x15x128xbf16>, vector<12x1x128xbf16> -> vector<12x16x128xbf16>
    %7 = tpu.concatenate %4, %1, %6 in 2 : vector<12x16x128xbf16>, vector<12x16x128xbf16>, vector<12x16x128xbf16> -> vector<12x16x384xbf16>
    %cst_4 = arith.constant 0.000000e+00 : f32
    %8 = vector.broadcast %cst_4 : f32 to vector<160x128xf32>
    %9 = vector.extract_strided_slice %7 {offsets = [0, 0, 0], sizes = [10, 16, 384], strides = [1, 1, 1]} : vector<12x16x384xbf16> to vector<10x16x384xbf16>
    %10 = vector.shape_cast %9 : vector<10x16x384xbf16> to vector<160x384xbf16>
    %c0_5 = arith.constant 0 : index
    %c0_6 = arith.constant 0 : index
    %c0_7 = arith.constant 0 : index
    %11 = vector.load %arg3[%c0_5, %c0_6, %c0_7] : memref<3x384x128xbf16, #tpu.memory_space<vmem>>, vector<1x384x128xbf16>
    %12 = vector.shape_cast %11 : vector<1x384x128xbf16> to vector<384x128xbf16>
    %cst_8 = arith.constant dense<0.000000e+00> : vector<160x128xf32>
    %13 = tpu.matmul %10, %12, %cst_8 {dimension_numbers = #tpu.dot_dimension_numbers<[1], [0], [0], [1], [0, 0, 1, 1], [], []>} : vector<160x384xbf16>, vector<384x128xbf16>, vector<160x128xf32> -> vector<160x128xf32>
    %14 = arith.addf %8, %13 : vector<160x128xf32>
    %15 = vector.extract_strided_slice %7 {offsets = [1, 0, 0], sizes = [10, 16, 384], strides = [1, 1, 1]} : vector<12x16x384xbf16> to vector<10x16x384xbf16>
    %16 = vector.shape_cast %15 : vector<10x16x384xbf16> to vector<160x384xbf16>
    %c1 = arith.constant 1 : index
    %c0_9 = arith.constant 0 : index
    %c0_10 = arith.constant 0 : index
    %17 = vector.load %arg3[%c1, %c0_9, %c0_10] : memref<3x384x128xbf16, #tpu.memory_space<vmem>>, vector<1x384x128xbf16>
    %18 = vector.shape_cast %17 : vector<1x384x128xbf16> to vector<384x128xbf16>
    %cst_11 = arith.constant dense<0.000000e+00> : vector<160x128xf32>
    %19 = tpu.matmul %16, %18, %cst_11 {dimension_numbers = #tpu.dot_dimension_numbers<[1], [0], [0], [1], [0, 0, 1, 1], [], []>} : vector<160x384xbf16>, vector<384x128xbf16>, vector<160x128xf32> -> vector<160x128xf32>
    %20 = arith.addf %14, %19 : vector<160x128xf32>
    %21 = vector.extract_strided_slice %7 {offsets = [2, 0, 0], sizes = [10, 16, 384], strides = [1, 1, 1]} : vector<12x16x384xbf16> to vector<10x16x384xbf16>
    %22 = vector.shape_cast %21 : vector<10x16x384xbf16> to vector<160x384xbf16>
    %c2 = arith.constant 2 : index
    %c0_12 = arith.constant 0 : index
    %c0_13 = arith.constant 0 : index
    %23 = vector.load %arg3[%c2, %c0_12, %c0_13] : memref<3x384x128xbf16, #tpu.memory_space<vmem>>, vector<1x384x128xbf16>
    %24 = vector.shape_cast %23 : vector<1x384x128xbf16> to vector<384x128xbf16>
    %cst_14 = arith.constant dense<0.000000e+00> : vector<160x128xf32>
    %25 = tpu.matmul %22, %24, %cst_14 {dimension_numbers = #tpu.dot_dimension_numbers<[1], [0], [0], [1], [0, 0, 1, 1], [], []>} : vector<160x384xbf16>, vector<384x128xbf16>, vector<160x128xf32> -> vector<160x128xf32>
    %26 = arith.addf %20, %25 : vector<160x128xf32>
    %cst_15 = arith.constant 0.000000e+00 : f32
    %27 = vector.broadcast %cst_15 : f32 to vector<160x128xf32>
    %28 = arith.maximumf %26, %27 : vector<160x128xf32>
    %29 = vector.shape_cast %28 : vector<160x128xf32> to vector<10x16x128xf32>
    %30 = tpu.iota {dimensions = array<i32: 0>} : vector<10x1x1xi32>
    %c8_i32 = arith.constant 8 : i32
    %31 = arith.muli %arg1, %c8_i32 : i32
    %c1_i32 = arith.constant 1 : i32
    %32 = arith.subi %31, %c1_i32 : i32
    %33 = vector.broadcast %32 : i32 to vector<10x1x1xi32>
    %34 = arith.addi %30, %33 : vector<10x1x1xi32>
    %c0_i32 = arith.constant 0 : i32
    %35 = vector.broadcast %c0_i32 : i32 to vector<10x1x1xi32>
    %36 = arith.cmpi sge, %34, %35 : vector<10x1x1xi32>
    %c16_i32 = arith.constant 16 : i32
    %37 = vector.broadcast %c16_i32 : i32 to vector<10x1x1xi32>
    %38 = arith.cmpi slt, %34, %37 : vector<10x1x1xi32>
    %39 = arith.andi %36, %38 : vector<10x1x1xi1>
    %cst_16 = arith.constant 0.000000e+00 : f32
    %40 = vector.shape_cast %39 : vector<10x1x1xi1> to vector<10x1x1xi1>
    %41 = vector.broadcast %40 : vector<10x1x1xi1> to vector<10x16x128xi1>
    %42 = vector.broadcast %cst_16 : f32 to vector<10x16x128xf32>
    %43 = arith.select %41, %29, %42 : vector<10x16x128xi1>, vector<10x16x128xf32>
    %44 = arith.truncf %43 : vector<10x16x128xf32> to vector<10x16x128xbf16>
    %cst_17 = arith.constant 0.000000e+00 : bf16
    %45 = vector.broadcast %cst_17 : bf16 to vector<10x1x128xbf16>
    %46 = vector.extract_strided_slice %44 {offsets = [0, 0, 0], sizes = [10, 15, 128], strides = [1, 1, 1]} : vector<10x16x128xbf16> to vector<10x15x128xbf16>
    %47 = tpu.concatenate %45, %46 in 1 : vector<10x1x128xbf16>, vector<10x15x128xbf16> -> vector<10x16x128xbf16>
    %48 = vector.extract_strided_slice %44 {offsets = [0, 1, 0], sizes = [10, 15, 128], strides = [1, 1, 1]} : vector<10x16x128xbf16> to vector<10x15x128xbf16>
    %49 = tpu.concatenate %48, %45 in 1 : vector<10x15x128xbf16>, vector<10x1x128xbf16> -> vector<10x16x128xbf16>
    %50 = tpu.concatenate %47, %44, %49 in 2 : vector<10x16x128xbf16>, vector<10x16x128xbf16>, vector<10x16x128xbf16> -> vector<10x16x384xbf16>
    %cst_18 = arith.constant 0.000000e+00 : f32
    %51 = vector.broadcast %cst_18 : f32 to vector<128x128xf32>
    %52 = vector.extract_strided_slice %50 {offsets = [0, 0, 0], sizes = [8, 16, 384], strides = [1, 1, 1]} : vector<10x16x384xbf16> to vector<8x16x384xbf16>
    %53 = vector.shape_cast %52 : vector<8x16x384xbf16> to vector<128x384xbf16>
    %c0_19 = arith.constant 0 : index
    %c0_20 = arith.constant 0 : index
    %c0_21 = arith.constant 0 : index
    %54 = vector.load %arg4[%c0_19, %c0_20, %c0_21] : memref<3x384x128xbf16, #tpu.memory_space<vmem>>, vector<1x384x128xbf16>
    %55 = vector.shape_cast %54 : vector<1x384x128xbf16> to vector<384x128xbf16>
    %cst_22 = arith.constant dense<0.000000e+00> : vector<128x128xf32>
    %56 = tpu.matmul %53, %55, %cst_22 {dimension_numbers = #tpu.dot_dimension_numbers<[1], [0], [0], [1], [0, 0, 1, 1], [], []>} : vector<128x384xbf16>, vector<384x128xbf16>, vector<128x128xf32> -> vector<128x128xf32>
    %57 = arith.addf %51, %56 : vector<128x128xf32>
    %58 = vector.extract_strided_slice %50 {offsets = [1, 0, 0], sizes = [8, 16, 384], strides = [1, 1, 1]} : vector<10x16x384xbf16> to vector<8x16x384xbf16>
    %59 = vector.shape_cast %58 : vector<8x16x384xbf16> to vector<128x384xbf16>
    %c1_23 = arith.constant 1 : index
    %c0_24 = arith.constant 0 : index
    %c0_25 = arith.constant 0 : index
    %60 = vector.load %arg4[%c1_23, %c0_24, %c0_25] : memref<3x384x128xbf16, #tpu.memory_space<vmem>>, vector<1x384x128xbf16>
    %61 = vector.shape_cast %60 : vector<1x384x128xbf16> to vector<384x128xbf16>
    %cst_26 = arith.constant dense<0.000000e+00> : vector<128x128xf32>
    %62 = tpu.matmul %59, %61, %cst_26 {dimension_numbers = #tpu.dot_dimension_numbers<[1], [0], [0], [1], [0, 0, 1, 1], [], []>} : vector<128x384xbf16>, vector<384x128xbf16>, vector<128x128xf32> -> vector<128x128xf32>
    %63 = arith.addf %57, %62 : vector<128x128xf32>
    %64 = vector.extract_strided_slice %50 {offsets = [2, 0, 0], sizes = [8, 16, 384], strides = [1, 1, 1]} : vector<10x16x384xbf16> to vector<8x16x384xbf16>
    %65 = vector.shape_cast %64 : vector<8x16x384xbf16> to vector<128x384xbf16>
    %c2_27 = arith.constant 2 : index
    %c0_28 = arith.constant 0 : index
    %c0_29 = arith.constant 0 : index
    %66 = vector.load %arg4[%c2_27, %c0_28, %c0_29] : memref<3x384x128xbf16, #tpu.memory_space<vmem>>, vector<1x384x128xbf16>
    %67 = vector.shape_cast %66 : vector<1x384x128xbf16> to vector<384x128xbf16>
    %cst_30 = arith.constant dense<0.000000e+00> : vector<128x128xf32>
    %68 = tpu.matmul %65, %67, %cst_30 {dimension_numbers = #tpu.dot_dimension_numbers<[1], [0], [0], [1], [0, 0, 1, 1], [], []>} : vector<128x384xbf16>, vector<384x128xbf16>, vector<128x128xf32> -> vector<128x128xf32>
    %69 = arith.addf %63, %68 : vector<128x128xf32>
    %cst_31 = arith.constant 0.000000e+00 : f32
    %70 = vector.broadcast %cst_31 : f32 to vector<128x128xf32>
    %71 = arith.maximumf %69, %70 : vector<128x128xf32>
    %72 = vector.shape_cast %71 : vector<128x128xf32> to vector<1x8x16x128xf32>
    %73 = arith.truncf %72 : vector<1x8x16x128xf32> to vector<1x8x16x128xbf16>
    %c0_32 = arith.constant 0 : index
    %c0_33 = arith.constant 0 : index
    %c0_34 = arith.constant 0 : index
    %c0_35 = arith.constant 0 : index
    %74 = vector.load %arg5[%c0_32, %c0_33, %c0_34, %c0_35] : memref<1x8x16x128xbf16, #tpu.memory_space<vmem>>, vector<1x8x16x128xbf16>
    tpu.vector_store %arg5[%c0_32, %c0_33, %c0_34, %c0_35], %73 {strides = array<i32>} : memref<1x8x16x128xbf16, #tpu.memory_space<vmem>>, vector<1x8x16x128xbf16>,
    return
  }
  func.func @transform_0(%arg0: i32, %arg1: i32) -> (i32, i32, i32, i32, i32) {
    %c0_i32 = arith.constant 0 : i32
    %c0_i32_0 = arith.constant 0 : i32
    %c0_i32_1 = arith.constant 0 : i32
    %c0_i32_2 = arith.constant 0 : i32
    return %arg0, %arg1, %c0_i32, %c0_i32_0, %c0_i32_1 : i32, i32, i32, i32, i32
  }
  func.func @transform_1(%arg0: i32, %arg1: i32) -> (i32, i32, i32) {
    %c0_i32 = arith.constant 0 : i32
    %c0_i32_0 = arith.constant 0 : i32
    %c0_i32_1 = arith.constant 0 : i32
    %c0_i32_2 = arith.constant 0 : i32
    return %c0_i32, %c0_i32_0, %c0_i32_1 : i32, i32, i32
  }
  func.func @transform_2(%arg0: i32, %arg1: i32) -> (i32, i32, i32) {
    %c0_i32 = arith.constant 0 : i32
    %c0_i32_0 = arith.constant 0 : i32
    %c0_i32_1 = arith.constant 0 : i32
    %c0_i32_2 = arith.constant 0 : i32
    return %c0_i32, %c0_i32_0, %c0_i32_1 : i32, i32, i32
  }
  func.func @transform_3(%arg0: i32, %arg1: i32) -> (i32, i32, i32, i32) {
    %c0_i32 = arith.constant 0 : i32
    %c0_i32_0 = arith.constant 0 : i32
    %c0_i32_1 = arith.constant 0 : i32
    return %arg0, %arg1, %c0_i32, %c0_i32_0 : i32, i32, i32, i32
  }
}

</mosaic_0001>

<llo_original>
// kernel: up_forward.1
$region0: #{up_forward.1}
  #allocation0 [shape = 'u32[]', space=smem, size = 0x4, offset = 0x4, fixed_abs, tag = 'smem constant byte address 0x4 - core index']
  #allocation1 [shape = 'u32[72,128]{1,0:T(1,128)}', space=vmem, size = 0x9000, scoped, tag = 'internal scratch']
  %s0 = inlined_call_operand.vmem [shape: bf16[2,2,12,16,128], index: 0, kind: input, shape index: {}]
  %s1 = inlined_call_operand.vmem [shape: bf16[3,384,128], index: 1, kind: input, shape index: {}]
  %s2 = inlined_call_operand.vmem [shape: bf16[3,384,128], index: 2, kind: input, shape index: {}]
  %s3 = inlined_call_operand.vmem [shape: bf16[2,16,16,128], index: 3, kind: output, shape index: {}]
  %s4 = sld [smem:[#allocation0]]
  $region45: #{up_forward.1} parent=0
    _
  %s6 = ssub.s32 1, %s4
  %s7 = scalar_select 0, %s6, %s4
  loop: start=0, step=1, limit=6
  $region2: #{up_forward.1} parent=0 // loop_pre_header
    _
  $region3: #{up_forward.1} parent=0 // loop_header
    %s9 = sphi 0, %s13
    %p10 = scmp.ge.s32.totalorder %s9, 6
    %s16 = sphi 0, %s28
    %s17 = sphi 0, %s24
    %s18 = sphi 0, %s16
    %s19 = sphi 0, %s17
    %s20 = sphi 0, %s18
    %s21 = sphi 0, %s19
    %s33 = sphi 0, %s35
    %s36 = sphi 0, %s33
    %s37 = sphi 0, %s36
    %s53 = sphi 0, %s37
    %s57 = sphi 0, %s57
    %s59 = sphi 0, %s57
    %s60 = sphi 0, %s59
    %s74 = sphi 0, %s60
    %s78 = sphi 0, %s78
    %s80 = sphi 0, %s78
    %s81 = sphi 0, %s80
    %s95 = sphi 0, %s81
    %s103 = sphi 0, %s105
    %s106 = sphi 0, %s103
    %s107 = sphi 0, %s106
    %s123 = sphi 0, %s107
  $region4: #{up_forward.1} parent=0 // loop_header_branch
    %12 = sbr.rel (%p10) target = $region8
  $region5: #{up_forward.1} parent=0 // loop_body
    %s14 = ssub.s32 %s9, 1
    %s15 = ssub.s32 %s9, 2
    %s22 = sadd.s32 1, %s17
    %p23 = scmp.ge.s32.totalorder %s22, 2
    %s24 = scalar_select %p23, 0, %s22
    %s25 = sadd.s32 1, %s16
    %s26 = scalar_select %p23, %s25, %s16
    %p27 = scmp.ge.s32.totalorder %s26, 2
    %s28 = scalar_select %p27, 0, %s26
    %s29 = ssub.s32 %s16, %s28
    %s30 = ssub.s32 %s17, %s24
    %s31 = sor.u32 %s29, %s30
    %p32 = scmp.eq.s32.totalorder %s31, 0
    %s34 = sadd.s32 %s33, 1
    %s35 = scalar_select %p32, %s33, %s34
    %p38 = pneg %p32
    %p39 = scmp.eq.s32.totalorder %s9, 3
    %p40 = por %p38, %p39
    %p41 = scmp.ne.s32.totalorder %s33, %s36
    %p42 = scmp.eq.s32.totalorder %s9, 0
    %p43 = por %p41, %p42
    %p44 = scmp.ne.s32.totalorder %s33, %s36
    %p45 = scmp.eq.s32.totalorder %s14, 3
    %p46 = por %p44, %p45
    %p47 = scmp.ne.s32.totalorder %s36, %s37
    %p48 = scmp.eq.s32.totalorder %s14, 0
    %p49 = por %p47, %p48
    %p50 = scmp.ne.s32.totalorder %s36, %s37
    %p51 = scmp.eq.s32.totalorder %s15, 3
    %p52 = por %p50, %p51
    %p54 = scmp.ne.s32.totalorder %s37, %s53
    %p55 = scmp.eq.s32.totalorder %s15, 0
    %p56 = por %p54, %p55
    %s58 = sadd.s32 %s57, 1
    %p61 = scmp.eq.s32.totalorder %s9, 3
    %p62 = scmp.ne.s32.totalorder %s57, %s59
    %p63 = scmp.eq.s32.totalorder %s9, 0
    %p64 = por %p62, %p63
    %p65 = scmp.ne.s32.totalorder %s57, %s59
    %p66 = scmp.eq.s32.totalorder %s14, 3
    %p67 = por %p65, %p66
    %p68 = scmp.ne.s32.totalorder %s59, %s60
    %p69 = scmp.eq.s32.totalorder %s14, 0
    %p70 = por %p68, %p69
    %p71 = scmp.ne.s32.totalorder %s59, %s60
    %p72 = scmp.eq.s32.totalorder %s15, 3
    %p73 = por %p71, %p72
    %p75 = scmp.ne.s32.totalorder %s60, %s74
    %p76 = scmp.eq.s32.totalorder %s15, 0
    %p77 = por %p75, %p76
    %s79 = sadd.s32 %s78, 1
    %p82 = scmp.eq.s32.totalorder %s9, 3
    %p83 = scmp.ne.s32.totalorder %s78, %s80
    %p84 = scmp.eq.s32.totalorder %s9, 0
    %p85 = por %p83, %p84
    %p86 = scmp.ne.s32.totalorder %s78, %s80
    %p87 = scmp.eq.s32.totalorder %s14, 3
    %p88 = por %p86, %p87
    %p89 = scmp.ne.s32.totalorder %s80, %s81
    %p90 = scmp.eq.s32.totalorder %s14, 0
    %p91 = por %p89, %p90
    %p92 = scmp.ne.s32.totalorder %s80, %s81
    %p93 = scmp.eq.s32.totalorder %s15, 3
    %p94 = por %p92, %p93
    %p96 = scmp.ne.s32.totalorder %s81, %s95
    %p97 = scmp.eq.s32.totalorder %s15, 0
    %p98 = por %p96, %p97
    %s99 = ssub.s32 %s16, %s28
    %s100 = ssub.s32 %s17, %s24
    %s101 = sor.u32 %s99, %s100
    %p102 = scmp.eq.s32.totalorder %s101, 0
    %s104 = sadd.s32 %s103, 1
    %s105 = scalar_select %p102, %s103, %s104
    %p108 = pneg %p102
    %p109 = scmp.eq.s32.totalorder %s9, 3
    %p110 = por %p108, %p109
    %p111 = scmp.ne.s32.totalorder %s103, %s106
    %p112 = scmp.eq.s32.totalorder %s9, 0
    %p113 = por %p111, %p112
    %p114 = scmp.ne.s32.totalorder %s103, %s106
    %p115 = scmp.eq.s32.totalorder %s14, 3
    %p116 = por %p114, %p115
    %p117 = scmp.ne.s32.totalorder %s106, %s107
    %p118 = scmp.eq.s32.totalorder %s14, 0
    %p119 = por %p117, %p118
    %p120 = scmp.ne.s32.totalorder %s106, %s107
    %p121 = scmp.eq.s32.totalorder %s15, 3
    %p122 = por %p120, %p121
    %p124 = scmp.ne.s32.totalorder %s107, %s123
    %p125 = scmp.eq.s32.totalorder %s15, 0
    %p126 = por %p124, %p125
    %p127 = scmp.le.s32.totalorder 1, %s9
    %p128 = scmp.lt.s32.totalorder %s9, 5
    %p129 = pnand %p127, %p128
    %p130 = pneg %p129
    // Predicated region
    $region9: #{up_forward.1} parent=5 // pred_check
      _
    $region10: #{up_forward.1} parent=5 // pred_check_branch
      %132 = sbr.rel (%p129) target = $region12
    $region11: #{up_forward.1} parent=5 // pred_region
      %s133 = ssub.s32 %s9, 1
      // Predicated region
      $region13: #{up_forward.1} parent=11 // pred_check
        %p134 = pneg %p70
      $region14: #{up_forward.1} parent=11 // pred_check_branch
        %136 = sbr.rel (%p134) target = $region16
      $region15: #{up_forward.1} parent=11 // pred_region
        _
      $region16: #{up_forward.1} parent=11 // pred_fallthru
        _
      // Predicated region
      $region17: #{up_forward.1} parent=11 // pred_check
        %p137 = pneg %p91
      $region18: #{up_forward.1} parent=11 // pred_check_branch
        %139 = sbr.rel (%p137) target = $region20
      $region19: #{up_forward.1} parent=11 // pred_region
        _
      $region20: #{up_forward.1} parent=11 // pred_fallthru
        _
    $region12: #{up_forward.1} parent=5 // pred_fallthru
      _
    %p140 = scmp.lt.s32.totalorder %s9, 4
    // Predicated region
    $region21: #{up_forward.1} parent=5 // pred_check
      %p141 = pneg %p140
    $region22: #{up_forward.1} parent=5 // pred_check_branch
      %143 = sbr.rel (%p141) target = $region24
    $region23: #{up_forward.1} parent=5 // pred_region
      // Predicated region
      $region25: #{up_forward.1} parent=23 // pred_check
        %p144 = pneg %p43
      $region26: #{up_forward.1} parent=23 // pred_check_branch
        %146 = sbr.rel (%p144) target = $region28
      $region27: #{up_forward.1} parent=23 // pred_region
        %p147 = scmp.lt.s32.totalorder %s16, 1
        %s148 = scalar_select %p147, %s16, 1
        %p149 = scmp.lt.s32.totalorder %s17, 1
        %s150 = scalar_select %p149, %s17, 1
        %s151 = smul.addr %s150, 24
        %s152 = smul.addr %s148, 48
        %s153 = sadd.s32 %s151, %s152
        %s154 = smul.addr %s153, 4
        %s155 = scalar_lea.vmem %s0, %s154
      $region28: #{up_forward.1} parent=23 // pred_fallthru
        _
    $region24: #{up_forward.1} parent=5 // pred_fallthru
      _
    %p156 = scmp.le.s32.totalorder 1, %s9
    %p157 = scmp.lt.s32.totalorder %s9, 5
    %p158 = pnand %p156, %p157
    %p159 = pneg %p158
    // Predicated region
    $region29: #{up_forward.1} parent=5 // pred_check
      _
    $region30: #{up_forward.1} parent=5 // pred_check_branch
      %161 = sbr.rel (%p158) target = $region32
    $region31: #{up_forward.1} parent=5 // pred_region
      %s162 = ssub.s32 %s9, 1
      %p163 = scmp.lt.s32.totalorder %s18, 1
      %s164 = scalar_select %p163, %s18, 1
      %p165 = scmp.lt.s32.totalorder %s19, 1
      %s166 = scalar_select %p165, %s19, 1
      %s167 = smul.addr %s166, 24
      %s168 = smul.addr %s164, 48
      %s169 = sadd.s32 %s167, %s168
      %s170 = smul.addr %s169, 4
      %s171 = scalar_lea.vmem %s0, %s170
      %p172 = pneg %p49
      %p173 = pneg %p46
      %p174 = pneg %p70
      %p175 = pneg %p67
      %p176 = pneg %p91
      %p177 = pneg %p88
      %p178 = pneg %p119
      %p179 = pneg %p116
      %s180 = smul.u32 8, %s19
      %p181 = scmp.lt.s32.totalorder %s18, 1
      %s182 = scalar_select %p181, %s18, 1
      %p183 = scmp.lt.s32.totalorder %s180, 15
      %s184 = scalar_select %p183, %s180, 15
      %s185 = smul.addr %s184, 2
      %s186 = smul.addr %s182, 32
      %s187 = sadd.s32 %s185, %s186
      %s188 = smul.addr %s187, 4
      %s189 = scalar_lea.vmem %s3, %s188
      %p190 = scmp.lt.s32.totalorder %s18, 1
      %s191 = scalar_select %p190, %s18, 1
      %p192 = scmp.lt.s32.totalorder %s19, 1
      %s193 = scalar_select %p192, %s19, 1
      %s194 = smul.addr %s193, 24
      %s195 = smul.addr %s191, 48
      %s196 = sadd.s32 %s194, %s195
      %s197 = smul.addr %s196, 4
      %s198 = scalar_lea.vmem %s0, %s197
      %s199 = smul.u32 8, %s19
      %p200 = scmp.lt.s32.totalorder %s18, 1
      %s201 = scalar_select %p200, %s18, 1
      %p202 = scmp.lt.s32.totalorder %s199, 15
      %s203 = scalar_select %p202, %s199, 15
      %s204 = smul.addr %s203, 2
      %s205 = smul.addr %s201, 32
      %s206 = sadd.s32 %s204, %s205
      %s207 = smul.addr %s206, 4
      %s208 = scalar_lea.vmem %s3, %s207
      %s209 = smul.u32 8, %s19
      %v211 = vld [vmem:[%s198] sm:$0xf]
      %v212 = vld [vmem:[%s198 + $0x4] sm:$0xf]
      %v213 = vld [vmem:[%s198 + $0x8] sm:$0xf]
      %v214 = vld [vmem:[%s198 + $0xc] sm:$0xf]
      %v215 = vld [vmem:[%s198 + $0x10] sm:$0xf]
      %v216 = vld [vmem:[%s198 + $0x14] sm:$0xf]
      %v217 = vld [vmem:[%s198 + $0x18] sm:$0xf]
      %v218 = vld [vmem:[%s198 + $0x1c] sm:$0xf]
      %v219 = vld [vmem:[%s198 + $0x20] sm:$0xf]
      %v220 = vld [vmem:[%s198 + $0x24] sm:$0xf]
      %v221 = vld [vmem:[%s198 + $0x28] sm:$0xf]
      %v222 = vld [vmem:[%s198 + $0x2c] sm:$0xf]
      %v223 = vld [vmem:[%s198 + $0x30] sm:$0xf]
      %v224 = vld [vmem:[%s198 + $0x34] sm:$0xf]
      %v225 = vld [vmem:[%s198 + $0x38] sm:$0xf]
      %v226 = vld [vmem:[%s198 + $0x3c] sm:$0xf]
      %v227 = vld [vmem:[%s198 + $0x40] sm:$0xf]
      %v228 = vld [vmem:[%s198 + $0x44] sm:$0xf]
      %v229 = vld [vmem:[%s198 + $0x48] sm:$0xf]
      %v230 = vld [vmem:[%s198 + $0x4c] sm:$0xf]
      %v231 = vld [vmem:[%s198 + $0x50] sm:$0xf]
      %v232 = vld [vmem:[%s198 + $0x54] sm:$0xf]
      %v233 = vld [vmem:[%s198 + $0x58] sm:$0xf]
      %v234 = vld [vmem:[%s198 + $0x5c] sm:$0xf]
      %v259 = vunpack.c.l.b16 %v211
      %v260 = vunpack.c.l.b16 %v212
      %v261 = vunpack.c.l.b16 %v213
      %v262 = vunpack.c.l.b16 %v214
      %v263 = vunpack.c.l.b16 %v215
      %v264 = vunpack.c.l.b16 %v216
      %v265 = vunpack.c.l.b16 %v217
      %v266 = vunpack.c.l.b16 %v218
      %v267 = vunpack.c.l.b16 %v219
      %v268 = vunpack.c.l.b16 %v220
      %v269 = vunpack.c.l.b16 %v221
      %v270 = vunpack.c.l.b16 %v222
      %v271 = vunpack.c.l.b16 %v223
      %v272 = vunpack.c.l.b16 %v224
      %v273 = vunpack.c.l.b16 %v225
      %v274 = vunpack.c.l.b16 %v226
      %v275 = vunpack.c.l.b16 %v227
      %v276 = vunpack.c.l.b16 %v228
      %v277 = vunpack.c.l.b16 %v229
      %v278 = vunpack.c.l.b16 %v230
      %v279 = vunpack.c.l.b16 %v231
      %v280 = vunpack.c.l.b16 %v232
      %v281 = vunpack.c.l.b16 %v233
      %v282 = vunpack.c.l.b16 %v234
      %v283 = vpack.c.b16 %v260, %v259
      %v284 = vpack.c.b16 %v262, %v261
      %v285 = vpack.c.b16 %v264, %v263
      %v286 = vpack.c.b16 %v266, %v265
      %v287 = vpack.c.b16 %v268, %v267
      %v288 = vpack.c.b16 %v270, %v269
      %v289 = vpack.c.b16 %v272, %v271
      %v290 = vpack.c.b16 %v274, %v273
      %v291 = vpack.c.b16 %v276, %v275
      %v292 = vpack.c.b16 %v278, %v277
      %v293 = vpack.c.b16 %v280, %v279
      %v294 = vpack.c.b16 %v282, %v281
      %v296 = vshrl.u32 %v283, 16
      %v298 = vrot.slane %v296, 7
      %v299 = vshll.u32 %v283, 16
      %v301 = vor.u32 %v298, %v299
      %v303 = vshrl.u32 %v284, 16
      %v305 = vrot.slane %v303, 7
      %v306 = vshll.u32 %v284, 16
      %v308 = vor.u32 %v305, %v306
      %v310 = vshrl.u32 %v285, 16
      %v312 = vrot.slane %v310, 7
      %v313 = vshll.u32 %v285, 16
      %v315 = vor.u32 %v312, %v313
      %v317 = vshrl.u32 %v286, 16
      %v319 = vrot.slane %v317, 7
      %v320 = vshll.u32 %v286, 16
      %v322 = vor.u32 %v319, %v320
      %v324 = vshrl.u32 %v287, 16
      %v326 = vrot.slane %v324, 7
      %v327 = vshll.u32 %v287, 16
      %v329 = vor.u32 %v326, %v327
      %v331 = vshrl.u32 %v288, 16
      %v333 = vrot.slane %v331, 7
      %v334 = vshll.u32 %v288, 16
      %v336 = vor.u32 %v333, %v334
      %v338 = vshrl.u32 %v289, 16
      %v340 = vrot.slane %v338, 7
      %v341 = vshll.u32 %v289, 16
      %v343 = vor.u32 %v340, %v341
      %v345 = vshrl.u32 %v290, 16
      %v347 = vrot.slane %v345, 7
      %v348 = vshll.u32 %v290, 16
      %v350 = vor.u32 %v347, %v348
      %v352 = vshrl.u32 %v291, 16
      %v354 = vrot.slane %v352, 7
      %v355 = vshll.u32 %v291, 16
      %v357 = vor.u32 %v354, %v355
      %v359 = vshrl.u32 %v292, 16
      %v361 = vrot.slane %v359, 7
      %v362 = vshll.u32 %v292, 16
      %v364 = vor.u32 %v361, %v362
      %v366 = vshrl.u32 %v293, 16
      %v368 = vrot.slane %v366, 7
      %v369 = vshll.u32 %v293, 16
      %v371 = vor.u32 %v368, %v369
      %v373 = vshrl.u32 %v294, 16
      %v375 = vrot.slane %v373, 7
      %v376 = vshll.u32 %v294, 16
      %v378 = vor.u32 %v375, %v376
      %vm391 = vcmask 1040384
      %vm392 = vsmask.f32 256
      %vm393 = vmand %vm391, %vm392
      %v394 = vsel %vm393, 0, %v301
      %v395 = vsel %vm393, 0, %v308
      %v396 = vsel %vm393, 0, %v315
      %v397 = vsel %vm393, 0, %v322
      %v398 = vsel %vm393, 0, %v329
      %v399 = vsel %vm393, 0, %v336
      %v400 = vsel %vm393, 0, %v343
      %v401 = vsel %vm393, 0, %v350
      %v402 = vsel %vm393, 0, %v357
      %v403 = vsel %vm393, 0, %v364
      %v404 = vsel %vm393, 0, %v371
      %v405 = vsel %vm393, 0, %v378
      %v406 = vrot.slane %v299, 1
      %v407 = vor.u32 %v296, %v406
      %v408 = vrot.slane %v306, 1
      %v409 = vor.u32 %v303, %v408
      %v410 = vrot.slane %v313, 1
      %v411 = vor.u32 %v310, %v410
      %v412 = vrot.slane %v320, 1
      %v413 = vor.u32 %v317, %v412
      %v414 = vrot.slane %v327, 1
      %v415 = vor.u32 %v324, %v414
      %v416 = vrot.slane %v334, 1
      %v417 = vor.u32 %v331, %v416
      %v418 = vrot.slane %v341, 1
      %v419 = vor.u32 %v338, %v418
      %v420 = vrot.slane %v348, 1
      %v421 = vor.u32 %v345, %v420
      %v422 = vrot.slane %v355, 1
      %v423 = vor.u32 %v352, %v422
      %v424 = vrot.slane %v362, 1
      %v425 = vor.u32 %v359, %v424
      %v426 = vrot.slane %v369, 1
      %v427 = vor.u32 %v366, %v426
      %v428 = vrot.slane %v376, 1
      %v429 = vor.u32 %v373, %v428
      %vm442 = vcmask 1047552
      %vm443 = vsmask.f32 7424
      %vm444 = vmand %vm442, %vm443
      %v445 = vsel %vm444, %v407, 0
      %v446 = vsel %vm444, %v409, 0
      %v447 = vsel %vm444, %v411, 0
      %v448 = vsel %vm444, %v413, 0
      %v449 = vsel %vm444, %v415, 0
      %v450 = vsel %vm444, %v417, 0
      %v451 = vsel %vm444, %v419, 0
      %v452 = vsel %vm444, %v421, 0
      %v453 = vsel %vm444, %v423, 0
      %v454 = vsel %vm444, %v425, 0
      %v455 = vsel %vm444, %v427, 0
      %v456 = vsel %vm444, %v429, 0
      %v469 = vld [vmem:[%s1] sm:$0xf]
      %v470 = vld [vmem:[%s1 + $0x4] sm:$0xf]
      %v471 = vld [vmem:[%s1 + $0x8] sm:$0xf]
      %v472 = vld [vmem:[%s1 + $0xc] sm:$0xf]
      %v473 = vld [vmem:[%s1 + $0x10] sm:$0xf]
      %v474 = vld [vmem:[%s1 + $0x14] sm:$0xf]
      %v475 = vld [vmem:[%s1 + $0x18] sm:$0xf]
      %v476 = vld [vmem:[%s1 + $0x1c] sm:$0xf]
      %v477 = vld [vmem:[%s1 + $0x20] sm:$0xf]
      %v478 = vld [vmem:[%s1 + $0x24] sm:$0xf]
      %v479 = vld [vmem:[%s1 + $0x28] sm:$0xf]
      %v480 = vld [vmem:[%s1 + $0x2c] sm:$0xf]
      %v481 = vld [vmem:[%s1 + $0x30] sm:$0xf]
      %v482 = vld [vmem:[%s1 + $0x34] sm:$0xf]
      %v483 = vld [vmem:[%s1 + $0x38] sm:$0xf]
      %v484 = vld [vmem:[%s1 + $0x3c] sm:$0xf]
      %v485 = vld [vmem:[%s1 + $0x40] sm:$0xf]
      %v486 = vld [vmem:[%s1 + $0x44] sm:$0xf]
      %v487 = vld [vmem:[%s1 + $0x48] sm:$0xf]
      %v488 = vld [vmem:[%s1 + $0x4c] sm:$0xf]
      %v489 = vld [vmem:[%s1 + $0x50] sm:$0xf]
      %v490 = vld [vmem:[%s1 + $0x54] sm:$0xf]
      %v491 = vld [vmem:[%s1 + $0x58] sm:$0xf]
      %v492 = vld [vmem:[%s1 + $0x5c] sm:$0xf]
      %v493 = vld [vmem:[%s1 + $0x60] sm:$0xf]
      %v494 = vld [vmem:[%s1 + $0x64] sm:$0xf]
      %v495 = vld [vmem:[%s1 + $0x68] sm:$0xf]
      %v496 = vld [vmem:[%s1 + $0x6c] sm:$0xf]
      %v497 = vld [vmem:[%s1 + $0x70] sm:$0xf]
      %v498 = vld [vmem:[%s1 + $0x74] sm:$0xf]
      %v499 = vld [vmem:[%s1 + $0x78] sm:$0xf]
      %v500 = vld [vmem:[%s1 + $0x7c] sm:$0xf]
      %v501 = vld [vmem:[%s1 + $0x80] sm:$0xf]
      %v502 = vld [vmem:[%s1 + $0x84] sm:$0xf]
      %v503 = vld [vmem:[%s1 + $0x88] sm:$0xf]
      %v504 = vld [vmem:[%s1 + $0x8c] sm:$0xf]
      %v505 = vld [vmem:[%s1 + $0x90] sm:$0xf]
      %v506 = vld [vmem:[%s1 + $0x94] sm:$0xf]
      %v507 = vld [vmem:[%s1 + $0x98] sm:$0xf]
      %v508 = vld [vmem:[%s1 + $0x9c] sm:$0xf]
      %v509 = vld [vmem:[%s1 + $0xa0] sm:$0xf]
      %v510 = vld [vmem:[%s1 + $0xa4] sm:$0xf]
      %v511 = vld [vmem:[%s1 + $0xa8] sm:$0xf]
      %v512 = vld [vmem:[%s1 + $0xac] sm:$0xf]
      %v513 = vld [vmem:[%s1 + $0xb0] sm:$0xf]
      %v514 = vld [vmem:[%s1 + $0xb4] sm:$0xf]
      %v515 = vld [vmem:[%s1 + $0xb8] sm:$0xf]
      %v516 = vld [vmem:[%s1 + $0xbc] sm:$0xf]
      %s517 = scalar_lea.vmem %s1, 192
      %v518 = vld [vmem:[%s517] sm:$0xf]
      %v519 = vld [vmem:[%s517 + $0x4] sm:$0xf]
      %v520 = vld [vmem:[%s517 + $0x8] sm:$0xf]
      %v521 = vld [vmem:[%s517 + $0xc] sm:$0xf]
      %v522 = vld [vmem:[%s517 + $0x10] sm:$0xf]
      %v523 = vld [vmem:[%s517 + $0x14] sm:$0xf]
      %v524 = vld [vmem:[%s517 + $0x18] sm:$0xf]
      %v525 = vld [vmem:[%s517 + $0x1c] sm:$0xf]
      %v526 = vld [vmem:[%s517 + $0x20] sm:$0xf]
      %v527 = vld [vmem:[%s517 + $0x24] sm:$0xf]
      %v528 = vld [vmem:[%s517 + $0x28] sm:$0xf]
      %v529 = vld [vmem:[%s517 + $0x2c] sm:$0xf]
      %v530 = vld [vmem:[%s517 + $0x30] sm:$0xf]
      %v531 = vld [vmem:[%s517 + $0x34] sm:$0xf]
      %v532 = vld [vmem:[%s517 + $0x38] sm:$0xf]
      %v533 = vld [vmem:[%s517 + $0x3c] sm:$0xf]
      %v534 = vld [vmem:[%s517 + $0x40] sm:$0xf]
      %v535 = vld [vmem:[%s517 + $0x44] sm:$0xf]
      %v536 = vld [vmem:[%s517 + $0x48] sm:$0xf]
      %v537 = vld [vmem:[%s517 + $0x4c] sm:$0xf]
      %v538 = vld [vmem:[%s517 + $0x50] sm:$0xf]
      %v539 = vld [vmem:[%s517 + $0x54] sm:$0xf]
      %v540 = vld [vmem:[%s517 + $0x58] sm:$0xf]
      %v541 = vld [vmem:[%s517 + $0x5c] sm:$0xf]
      %v542 = vld [vmem:[%s517 + $0x60] sm:$0xf]
      %v543 = vld [vmem:[%s517 + $0x64] sm:$0xf]
      %v544 = vld [vmem:[%s517 + $0x68] sm:$0xf]
      %v545 = vld [vmem:[%s517 + $0x6c] sm:$0xf]
      %v546 = vld [vmem:[%s517 + $0x70] sm:$0xf]
      %v547 = vld [vmem:[%s517 + $0x74] sm:$0xf]
      %v548 = vld [vmem:[%s517 + $0x78] sm:$0xf]
      %v549 = vld [vmem:[%s517 + $0x7c] sm:$0xf]
      %v550 = vld [vmem:[%s517 + $0x80] sm:$0xf]
      %v551 = vld [vmem:[%s517 + $0x84] sm:$0xf]
      %v552 = vld [vmem:[%s517 + $0x88] sm:$0xf]
      %v553 = vld [vmem:[%s517 + $0x8c] sm:$0xf]
      %v554 = vld [vmem:[%s517 + $0x90] sm:$0xf]
      %v555 = vld [vmem:[%s517 + $0x94] sm:$0xf]
      %v556 = vld [vmem:[%s517 + $0x98] sm:$0xf]
      %v557 = vld [vmem:[%s517 + $0x9c] sm:$0xf]
      %v558 = vld [vmem:[%s517 + $0xa0] sm:$0xf]
      %v559 = vld [vmem:[%s517 + $0xa4] sm:$0xf]
      %v560 = vld [vmem:[%s517 + $0xa8] sm:$0xf]
      %v561 = vld [vmem:[%s517 + $0xac] sm:$0xf]
      %v562 = vld [vmem:[%s517 + $0xb0] sm:$0xf]
      %v563 = vld [vmem:[%s517 + $0xb4] sm:$0xf]
      %v564 = vld [vmem:[%s517 + $0xb8] sm:$0xf]
      %v565 = vld [vmem:[%s517 + $0xbc] sm:$0xf]
      %v614 = vunpack.c.l.b16 %v518
      %v615 = vunpack.c.l.b16 %v519
      %v616 = vunpack.c.l.b16 %v520
      %v617 = vunpack.c.l.b16 %v521
      %v618 = vunpack.c.l.b16 %v522
      %v619 = vunpack.c.l.b16 %v523
      %v620 = vunpack.c.l.b16 %v524
      %v621 = vunpack.c.l.b16 %v525
      %v622 = vunpack.c.l.b16 %v526
      %v623 = vunpack.c.l.b16 %v527
      %v624 = vunpack.c.l.b16 %v528
      %v625 = vunpack.c.l.b16 %v529
      %v626 = vunpack.c.l.b16 %v530
      %v627 = vunpack.c.l.b16 %v531
      %v628 = vunpack.c.l.b16 %v532
      %v629 = vunpack.c.l.b16 %v533
      %v630 = vunpack.c.l.b16 %v534
      %v631 = vunpack.c.l.b16 %v535
      %v632 = vunpack.c.l.b16 %v536
      %v633 = vunpack.c.l.b16 %v537
      %v634 = vunpack.c.l.b16 %v538
      %v635 = vunpack.c.l.b16 %v539
      %v636 = vunpack.c.l.b16 %v540
      %v637 = vunpack.c.l.b16 %v541
      %v638 = vunpack.c.l.b16 %v542
      %v639 = vunpack.c.l.b16 %v543
      %v640 = vunpack.c.l.b16 %v544
      %v641 = vunpack.c.l.b16 %v545
      %v642 = vunpack.c.l.b16 %v546
      %v643 = vunpack.c.l.b16 %v547
      %v644 = vunpack.c.l.b16 %v548
      %v645 = vunpack.c.l.b16 %v549
      %v646 = vunpack.c.l.b16 %v550
      %v647 = vunpack.c.l.b16 %v551
      %v648 = vunpack.c.l.b16 %v552
      %v649 = vunpack.c.l.b16 %v553
      %v650 = vunpack.c.l.b16 %v554
      %v651 = vunpack.c.l.b16 %v555
      %v652 = vunpack.c.l.b16 %v556
      %v653 = vunpack.c.l.b16 %v557
      %v654 = vunpack.c.l.b16 %v558
      %v655 = vunpack.c.l.b16 %v559
      %v656 = vunpack.c.l.b16 %v560
      %v657 = vunpack.c.l.b16 %v561
      %v658 = vunpack.c.l.b16 %v562
      %v659 = vunpack.c.l.b16 %v563
      %v660 = vunpack.c.l.b16 %v564
      %v661 = vunpack.c.l.b16 %v565
      %v662 = vpack.c.b16 %v615, %v614
      %v663 = vpack.c.b16 %v617, %v616
      %v664 = vpack.c.b16 %v619, %v618
      %v665 = vpack.c.b16 %v621, %v620
      %v666 = vpack.c.b16 %v623, %v622
      %v667 = vpack.c.b16 %v625, %v624
      %v668 = vpack.c.b16 %v627, %v626
      %v669 = vpack.c.b16 %v629, %v628
      %v670 = vpack.c.b16 %v631, %v630
      %v671 = vpack.c.b16 %v633, %v632
      %v672 = vpack.c.b16 %v635, %v634
      %v673 = vpack.c.b16 %v637, %v636
      %v674 = vpack.c.b16 %v639, %v638
      %v675 = vpack.c.b16 %v641, %v640
      %v676 = vpack.c.b16 %v643, %v642
      %v677 = vpack.c.b16 %v645, %v644
      %v678 = vpack.c.b16 %v647, %v646
      %v679 = vpack.c.b16 %v649, %v648
      %v680 = vpack.c.b16 %v651, %v650
      %v681 = vpack.c.b16 %v653, %v652
      %v682 = vpack.c.b16 %v655, %v654
      %v683 = vpack.c.b16 %v657, %v656
      %v684 = vpack.c.b16 %v659, %v658
      %v685 = vpack.c.b16 %v661, %v660
      %710 = vmatpush.bf16.msra.mxu0 %v669
      %711 = vmatpush.bf16.msra.mxu0 %v668
      %712 = vmatpush.bf16.msra.mxu0 %v667
      %713 = vmatpush.bf16.msra.mxu0 %v666
      %714 = vmatpush.bf16.msra.mxu0 %v665
      %715 = vmatpush.bf16.msra.mxu0 %v664
      %716 = vmatpush.bf16.msra.mxu0 %v663
      %717 = vmatpush.bf16.msra.mxu0 %v662
      %718 = vmatmul.bf16.gmra.mxu0 %v395
      %v719 = vpop.f32.mrf.mxu0
      %v720 = vadd.f32 0.0, %v719
      %v721 = vpop.f32.mrf.mxu0
      %v722 = vadd.f32 0.0, %v721
      %723 = vmatmul.bf16.gmra.mxu0 %v396
      %v724 = vpop.f32.mrf.mxu0
      %v725 = vadd.f32 0.0, %v724
      %v726 = vpop.f32.mrf.mxu0
      %v727 = vadd.f32 0.0, %v726
      %728 = vmatmul.bf16.gmra.mxu0 %v397
      %v729 = vpop.f32.mrf.mxu0
      %v730 = vadd.f32 0.0, %v729
      %v731 = vpop.f32.mrf.mxu0
      %v732 = vadd.f32 0.0, %v731
      %733 = vmatmul.bf16.gmra.mxu0 %v398
      %v734 = vpop.f32.mrf.mxu0
      %v735 = vadd.f32 0.0, %v734
      %v736 = vpop.f32.mrf.mxu0
      %v737 = vadd.f32 0.0, %v736
      %738 = vmatmul.bf16.gmra.mxu0 %v399
      %v739 = vpop.f32.mrf.mxu0
      %v740 = vadd.f32 0.0, %v739
      %v741 = vpop.f32.mrf.mxu0
      %v742 = vadd.f32 0.0, %v741
      %743 = vmatmul.bf16.gmra.mxu0 %v400
      %v744 = vpop.f32.mrf.mxu0
      %v745 = vadd.f32 0.0, %v744
      %v746 = vpop.f32.mrf.mxu0
      %v747 = vadd.f32 0.0, %v746
      %748 = vmatmul.bf16.gmra.mxu0 %v401
      %v749 = vpop.f32.mrf.mxu0
      %v750 = vadd.f32 0.0, %v749
      %v751 = vpop.f32.mrf.mxu0
      %v752 = vadd.f32 0.0, %v751
      %753 = vmatmul.bf16.gmra.mxu0 %v402
      %v754 = vpop.f32.mrf.mxu0
      %v755 = vadd.f32 0.0, %v754
      %v756 = vpop.f32.mrf.mxu0
      %v757 = vadd.f32 0.0, %v756
      %758 = vmatmul.bf16.gmra.mxu0 %v403
      %v759 = vpop.f32.mrf.mxu0
      %v760 = vadd.f32 0.0, %v759
      %v761 = vpop.f32.mrf.mxu0
      %v762 = vadd.f32 0.0, %v761
      %763 = vmatmul.bf16.gmra.mxu0 %v404
      %v764 = vpop.f32.mrf.mxu0
      %v765 = vadd.f32 0.0, %v764
      %v766 = vpop.f32.mrf.mxu0
      %v767 = vadd.f32 0.0, %v766
      %768 = vdwg.mxu0
      %769 = vmatpush.bf16.msra.mxu0 %v677
      %770 = vmatpush.bf16.msra.mxu0 %v676
      %771 = vmatpush.bf16.msra.mxu0 %v675
      %772 = vmatpush.bf16.msra.mxu0 %v674
      %773 = vmatpush.bf16.msra.mxu0 %v673
      %774 = vmatpush.bf16.msra.mxu0 %v672
      %775 = vmatpush.bf16.msra.mxu0 %v671
      %776 = vmatpush.bf16.msra.mxu0 %v670
      %777 = vmatmul.bf16.gmra.mxu0 %v284
      %v778 = vpop.f32.mrf.mxu0
      %v779 = vadd.f32 %v720, %v778
      %v780 = vpop.f32.mrf.mxu0
      %v781 = vadd.f32 %v722, %v780
      %782 = vmatmul.bf16.gmra.mxu0 %v285
      %v783 = vpop.f32.mrf.mxu0
      %v784 = vadd.f32 %v725, %v783
      %v785 = vpop.f32.mrf.mxu0
      %v786 = vadd.f32 %v727, %v785
      %787 = vmatmul.bf16.gmra.mxu0 %v286
      %v788 = vpop.f32.mrf.mxu0
      %v789 = vadd.f32 %v730, %v788
      %v790 = vpop.f32.mrf.mxu0
      %v791 = vadd.f32 %v732, %v790
      %792 = vmatmul.bf16.gmra.mxu0 %v287
      %v793 = vpop.f32.mrf.mxu0
      %v794 = vadd.f32 %v735, %v793
      %v795 = vpop.f32.mrf.mxu0
      %v796 = vadd.f32 %v737, %v795
      %797 = vmatmul.bf16.gmra.mxu0 %v288
      %v798 = vpop.f32.mrf.mxu0
      %v799 = vadd.f32 %v740, %v798
      %v800 = vpop.f32.mrf.mxu0
      %v801 = vadd.f32 %v742, %v800
      %802 = vmatmul.bf16.gmra.mxu0 %v289
      %v803 = vpop.f32.mrf.mxu0
      %v804 = vadd.f32 %v745, %v803
      %v805 = vpop.f32.mrf.mxu0
      %v806 = vadd.f32 %v747, %v805
      %807 = vmatmul.bf16.gmra.mxu0 %v290
      %v808 = vpop.f32.mrf.mxu0
      %v809 = vadd.f32 %v750, %v808
      %v810 = vpop.f32.mrf.mxu0
      %v811 = vadd.f32 %v752, %v810
      %812 = vmatmul.bf16.gmra.mxu0 %v291
      %v813 = vpop.f32.mrf.mxu0
      %v814 = vadd.f32 %v755, %v813
      %v815 = vpop.f32.mrf.mxu0
      %v816 = vadd.f32 %v757, %v815
      %817 = vmatmul.bf16.gmra.mxu0 %v292
      %v818 = vpop.f32.mrf.mxu0
      %v819 = vadd.f32 %v760, %v818
      %v820 = vpop.f32.mrf.mxu0
      %v821 = vadd.f32 %v762, %v820
      %822 = vmatmul.bf16.gmra.mxu0 %v293
      %v823 = vpop.f32.mrf.mxu0
      %v824 = vadd.f32 %v765, %v823
      %v825 = vpop.f32.mrf.mxu0
      %v826 = vadd.f32 %v767, %v825
      %827 = vdwg.mxu0
      %828 = vmatpush.bf16.msra.mxu0 %v685
      %829 = vmatpush.bf16.msra.mxu0 %v684
      %830 = vmatpush.bf16.msra.mxu0 %v683
      %831 = vmatpush.bf16.msra.mxu0 %v682
      %832 = vmatpush.bf16.msra.mxu0 %v681
      %833 = vmatpush.bf16.msra.mxu0 %v680
      %834 = vmatpush.bf16.msra.mxu0 %v679
      %835 = vmatpush.bf16.msra.mxu0 %v678
      %836 = vmatmul.bf16.gmra.mxu0 %v446
      %v837 = vpop.f32.mrf.mxu0
      %v838 = vadd.f32 %v779, %v837
      %v839 = vpop.f32.mrf.mxu0
      %v840 = vadd.f32 %v781, %v839
      %841 = vmatmul.bf16.gmra.mxu0 %v447
      %v842 = vpop.f32.mrf.mxu0
      %v843 = vadd.f32 %v784, %v842
      %v844 = vpop.f32.mrf.mxu0
      %v845 = vadd.f32 %v786, %v844
      %846 = vmatmul.bf16.gmra.mxu0 %v448
      %v847 = vpop.f32.mrf.mxu0
      %v848 = vadd.f32 %v789, %v847
      %v849 = vpop.f32.mrf.mxu0
      %v850 = vadd.f32 %v791, %v849
      %851 = vmatmul.bf16.gmra.mxu0 %v449
      %v852 = vpop.f32.mrf.mxu0
      %v853 = vadd.f32 %v794, %v852
      %v854 = vpop.f32.mrf.mxu0
      %v855 = vadd.f32 %v796, %v854
      %856 = vmatmul.bf16.gmra.mxu0 %v450
      %v857 = vpop.f32.mrf.mxu0
      %v858 = vadd.f32 %v799, %v857
      %v859 = vpop.f32.mrf.mxu0
      %v860 = vadd.f32 %v801, %v859
      %861 = vmatmul.bf16.gmra.mxu0 %v451
      %v862 = vpop.f32.mrf.mxu0
      %v863 = vadd.f32 %v804, %v862
      %v864 = vpop.f32.mrf.mxu0
      %v865 = vadd.f32 %v806, %v864
      %866 = vmatmul.bf16.gmra.mxu0 %v452
      %v867 = vpop.f32.mrf.mxu0
      %v868 = vadd.f32 %v809, %v867
      %v869 = vpop.f32.mrf.mxu0
      %v870 = vadd.f32 %v811, %v869
      %871 = vmatmul.bf16.gmra.mxu0 %v453
      %v872 = vpop.f32.mrf.mxu0
      %v873 = vadd.f32 %v814, %v872
      %v874 = vpop.f32.mrf.mxu0
      %v875 = vadd.f32 %v816, %v874
      %876 = vmatmul.bf16.gmra.mxu0 %v454
      %v877 = vpop.f32.mrf.mxu0
      %v878 = vadd.f32 %v819, %v877
      %v879 = vpop.f32.mrf.mxu0
      %v880 = vadd.f32 %v821, %v879
      %881 = vmatmul.bf16.gmra.mxu0 %v455
      %v882 = vpop.f32.mrf.mxu0
      %v883 = vadd.f32 %v824, %v882
      %v884 = vpop.f32.mrf.mxu0
      %v885 = vadd.f32 %v826, %v884
      %886 = vdwg.mxu0
      %v935 = vunpack.c.l.b16 %v469
      %v936 = vunpack.c.l.b16 %v470
      %v937 = vunpack.c.l.b16 %v471
      %v938 = vunpack.c.l.b16 %v472
      %v939 = vunpack.c.l.b16 %v473
      %v940 = vunpack.c.l.b16 %v474
      %v941 = vunpack.c.l.b16 %v475
      %v942 = vunpack.c.l.b16 %v476
      %v943 = vunpack.c.l.b16 %v477
      %v944 = vunpack.c.l.b16 %v478
      %v945 = vunpack.c.l.b16 %v479
      %v946 = vunpack.c.l.b16 %v480
      %v947 = vunpack.c.l.b16 %v481
      %v948 = vunpack.c.l.b16 %v482
      %v949 = vunpack.c.l.b16 %v483
      %v950 = vunpack.c.l.b16 %v484
      %v951 = vunpack.c.l.b16 %v485
      %v952 = vunpack.c.l.b16 %v486
      %v953 = vunpack.c.l.b16 %v487
      %v954 = vunpack.c.l.b16 %v488
      %v955 = vunpack.c.l.b16 %v489
      %v956 = vunpack.c.l.b16 %v490
      %v957 = vunpack.c.l.b16 %v491
      %v958 = vunpack.c.l.b16 %v492
      %v959 = vunpack.c.l.b16 %v493
      %v960 = vunpack.c.l.b16 %v494
      %v961 = vunpack.c.l.b16 %v495
      %v962 = vunpack.c.l.b16 %v496
      %v963 = vunpack.c.l.b16 %v497
      %v964 = vunpack.c.l.b16 %v498
      %v965 = vunpack.c.l.b16 %v499
      %v966 = vunpack.c.l.b16 %v500
      %v967 = vunpack.c.l.b16 %v501
      %v968 = vunpack.c.l.b16 %v502
      %v969 = vunpack.c.l.b16 %v503
      %v970 = vunpack.c.l.b16 %v504
      %v971 = vunpack.c.l.b16 %v505
      %v972 = vunpack.c.l.b16 %v506
      %v973 = vunpack.c.l.b16 %v507
      %v974 = vunpack.c.l.b16 %v508
      %v975 = vunpack.c.l.b16 %v509
      %v976 = vunpack.c.l.b16 %v510
      %v977 = vunpack.c.l.b16 %v511
      %v978 = vunpack.c.l.b16 %v512
      %v979 = vunpack.c.l.b16 %v513
      %v980 = vunpack.c.l.b16 %v514
      %v981 = vunpack.c.l.b16 %v515
      %v982 = vunpack.c.l.b16 %v516
      %v983 = vpack.c.b16 %v936, %v935
      %v984 = vpack.c.b16 %v938, %v937
      %v985 = vpack.c.b16 %v940, %v939
      %v986 = vpack.c.b16 %v942, %v941
      %v987 = vpack.c.b16 %v944, %v943
      %v988 = vpack.c.b16 %v946, %v945
      %v989 = vpack.c.b16 %v948, %v947
      %v990 = vpack.c.b16 %v950, %v949
      %v991 = vpack.c.b16 %v952, %v951
      %v992 = vpack.c.b16 %v954, %v953
      %v993 = vpack.c.b16 %v956, %v955
      %v994 = vpack.c.b16 %v958, %v957
      %v995 = vpack.c.b16 %v960, %v959
      %v996 = vpack.c.b16 %v962, %v961
      %v997 = vpack.c.b16 %v964, %v963
      %v998 = vpack.c.b16 %v966, %v965
      %v999 = vpack.c.b16 %v968, %v967
      %v1000 = vpack.c.b16 %v970, %v969
      %v1001 = vpack.c.b16 %v972, %v971
      %v1002 = vpack.c.b16 %v974, %v973
      %v1003 = vpack.c.b16 %v976, %v975
      %v1004 = vpack.c.b16 %v978, %v977
      %v1005 = vpack.c.b16 %v980, %v979
      %v1006 = vpack.c.b16 %v982, %v981
      %1031 = vmatpush.bf16.msra.mxu0 %v990
      %1032 = vmatpush.bf16.msra.mxu0 %v989
      %1033 = vmatpush.bf16.msra.mxu0 %v988
      %1034 = vmatpush.bf16.msra.mxu0 %v987
      %1035 = vmatpush.bf16.msra.mxu0 %v986
      %1036 = vmatpush.bf16.msra.mxu0 %v985
      %1037 = vmatpush.bf16.msra.mxu0 %v984
      %1038 = vmatpush.bf16.msra.mxu0 %v983
      %1039 = vmatmul.bf16.gmra.mxu0 %v394
      %v1040 = vpop.f32.mrf.mxu0
      %v1041 = vadd.f32 %v838, %v1040
      %v1042 = vpop.f32.mrf.mxu0
      %v1043 = vadd.f32 %v840, %v1042
      %1044 = vmatmul.bf16.gmra.mxu0 %v395
      %v1045 = vpop.f32.mrf.mxu0
      %v1046 = vadd.f32 %v843, %v1045
      %v1047 = vpop.f32.mrf.mxu0
      %v1048 = vadd.f32 %v845, %v1047
      %1049 = vmatmul.bf16.gmra.mxu0 %v396
      %v1050 = vpop.f32.mrf.mxu0
      %v1051 = vadd.f32 %v848, %v1050
      %v1052 = vpop.f32.mrf.mxu0
      %v1053 = vadd.f32 %v850, %v1052
      %1054 = vmatmul.bf16.gmra.mxu0 %v397
      %v1055 = vpop.f32.mrf.mxu0
      %v1056 = vadd.f32 %v853, %v1055
      %v1057 = vpop.f32.mrf.mxu0
      %v1058 = vadd.f32 %v855, %v1057
      %1059 = vmatmul.bf16.gmra.mxu0 %v398
      %v1060 = vpop.f32.mrf.mxu0
      %v1061 = vadd.f32 %v858, %v1060
      %v1062 = vpop.f32.mrf.mxu0
      %v1063 = vadd.f32 %v860, %v1062
      %1064 = vmatmul.bf16.gmra.mxu0 %v399
      %v1065 = vpop.f32.mrf.mxu0
      %v1066 = vadd.f32 %v863, %v1065
      %v1067 = vpop.f32.mrf.mxu0
      %v1068 = vadd.f32 %v865, %v1067
      %1069 = vmatmul.bf16.gmra.mxu0 %v400
      %v1070 = vpop.f32.mrf.mxu0
      %v1071 = vadd.f32 %v868, %v1070
      %v1072 = vpop.f32.mrf.mxu0
      %v1073 = vadd.f32 %v870, %v1072
      %1074 = vmatmul.bf16.gmra.mxu0 %v401
      %v1075 = vpop.f32.mrf.mxu0
      %v1076 = vadd.f32 %v873, %v1075
      %v1077 = vpop.f32.mrf.mxu0
      %v1078 = vadd.f32 %v875, %v1077
      %1079 = vmatmul.bf16.gmra.mxu0 %v402
      %v1080 = vpop.f32.mrf.mxu0
      %v1081 = vadd.f32 %v878, %v1080
      %v1082 = vpop.f32.mrf.mxu0
      %v1083 = vadd.f32 %v880, %v1082
      %1084 = vmatmul.bf16.gmra.mxu0 %v403
      %v1085 = vpop.f32.mrf.mxu0
      %v1086 = vadd.f32 %v883, %v1085
      %v1087 = vpop.f32.mrf.mxu0
      %v1088 = vadd.f32 %v885, %v1087
      %1089 = vdwg.mxu0
      %1090 = vmatpush.bf16.msra.mxu0 %v998
      %1091 = vmatpush.bf16.msra.mxu0 %v997
      %1092 = vmatpush.bf16.msra.mxu0 %v996
      %1093 = vmatpush.bf16.msra.mxu0 %v995
      %1094 = vmatpush.bf16.msra.mxu0 %v994
      %1095 = vmatpush.bf16.msra.mxu0 %v993
      %1096 = vmatpush.bf16.msra.mxu0 %v992
      %1097 = vmatpush.bf16.msra.mxu0 %v991
      %1098 = vmatmul.bf16.gmra.mxu0 %v283
      %v1099 = vpop.f32.mrf.mxu0
      %v1100 = vadd.f32 %v1041, %v1099
      %v1101 = vpop.f32.mrf.mxu0
      %v1102 = vadd.f32 %v1043, %v1101
      %1103 = vmatmul.bf16.gmra.mxu0 %v284
      %v1104 = vpop.f32.mrf.mxu0
      %v1105 = vadd.f32 %v1046, %v1104
      %v1106 = vpop.f32.mrf.mxu0
      %v1107 = vadd.f32 %v1048, %v1106
      %1108 = vmatmul.bf16.gmra.mxu0 %v285
      %v1109 = vpop.f32.mrf.mxu0
      %v1110 = vadd.f32 %v1051, %v1109
      %v1111 = vpop.f32.mrf.mxu0
      %v1112 = vadd.f32 %v1053, %v1111
      %1113 = vmatmul.bf16.gmra.mxu0 %v286
      %v1114 = vpop.f32.mrf.mxu0
      %v1115 = vadd.f32 %v1056, %v1114
      %v1116 = vpop.f32.mrf.mxu0
      %v1117 = vadd.f32 %v1058, %v1116
      %1118 = vmatmul.bf16.gmra.mxu0 %v287
      %v1119 = vpop.f32.mrf.mxu0
      %v1120 = vadd.f32 %v1061, %v1119
      %v1121 = vpop.f32.mrf.mxu0
      %v1122 = vadd.f32 %v1063, %v1121
      %1123 = vmatmul.bf16.gmra.mxu0 %v288
      %v1124 = vpop.f32.mrf.mxu0
      %v1125 = vadd.f32 %v1066, %v1124
      %v1126 = vpop.f32.mrf.mxu0
      %v1127 = vadd.f32 %v1068, %v1126
      %1128 = vmatmul.bf16.gmra.mxu0 %v289
      %v1129 = vpop.f32.mrf.mxu0
      %v1130 = vadd.f32 %v1071, %v1129
      %v1131 = vpop.f32.mrf.mxu0
      %v1132 = vadd.f32 %v1073, %v1131
      %1133 = vmatmul.bf16.gmra.mxu0 %v290
      %v1134 = vpop.f32.mrf.mxu0
      %v1135 = vadd.f32 %v1076, %v1134
      %v1136 = vpop.f32.mrf.mxu0
      %v1137 = vadd.f32 %v1078, %v1136
      %1138 = vmatmul.bf16.gmra.mxu0 %v291
      %v1139 = vpop.f32.mrf.mxu0
      %v1140 = vadd.f32 %v1081, %v1139
      %v1141 = vpop.f32.mrf.mxu0
      %v1142 = vadd.f32 %v1083, %v1141
      %1143 = vmatmul.bf16.gmra.mxu0 %v292
      %v1144 = vpop.f32.mrf.mxu0
      %v1145 = vadd.f32 %v1086, %v1144
      %v1146 = vpop.f32.mrf.mxu0
      %v1147 = vadd.f32 %v1088, %v1146
      %1148 = vdwg.mxu0
      %1149 = vmatpush.bf16.msra.mxu0 %v1006
      %1150 = vmatpush.bf16.msra.mxu0 %v1005
      %1151 = vmatpush.bf16.msra.mxu0 %v1004
      %1152 = vmatpush.bf16.msra.mxu0 %v1003
      %1153 = vmatpush.bf16.msra.mxu0 %v1002
      %1154 = vmatpush.bf16.msra.mxu0 %v1001
      %1155 = vmatpush.bf16.msra.mxu0 %v1000
      %1156 = vmatpush.bf16.msra.mxu0 %v999
      %1157 = vmatmul.bf16.gmra.mxu0 %v445
      %v1158 = vpop.f32.mrf.mxu0
      %v1159 = vadd.f32 %v1100, %v1158
      %v1160 = vpop.f32.mrf.mxu0
      %v1161 = vadd.f32 %v1102, %v1160
      %1162 = vmatmul.bf16.gmra.mxu0 %v446
      %v1163 = vpop.f32.mrf.mxu0
      %v1164 = vadd.f32 %v1105, %v1163
      %v1165 = vpop.f32.mrf.mxu0
      %v1166 = vadd.f32 %v1107, %v1165
      %1167 = vmatmul.bf16.gmra.mxu0 %v447
      %v1168 = vpop.f32.mrf.mxu0
      %v1169 = vadd.f32 %v1110, %v1168
      %v1170 = vpop.f32.mrf.mxu0
      %v1171 = vadd.f32 %v1112, %v1170
      %1172 = vmatmul.bf16.gmra.mxu0 %v448
      %v1173 = vpop.f32.mrf.mxu0
      %v1174 = vadd.f32 %v1115, %v1173
      %v1175 = vpop.f32.mrf.mxu0
      %v1176 = vadd.f32 %v1117, %v1175
      %1177 = vmatmul.bf16.gmra.mxu0 %v449
      %v1178 = vpop.f32.mrf.mxu0
      %v1179 = vadd.f32 %v1120, %v1178
      %v1180 = vpop.f32.mrf.mxu0
      %v1181 = vadd.f32 %v1122, %v1180
      %1182 = vmatmul.bf16.gmra.mxu0 %v450
      %v1183 = vpop.f32.mrf.mxu0
      %v1184 = vadd.f32 %v1125, %v1183
      %v1185 = vpop.f32.mrf.mxu0
      %v1186 = vadd.f32 %v1127, %v1185
      %1187 = vmatmul.bf16.gmra.mxu0 %v451
      %v1188 = vpop.f32.mrf.mxu0
      %v1189 = vadd.f32 %v1130, %v1188
      %v1190 = vpop.f32.mrf.mxu0
      %v1191 = vadd.f32 %v1132, %v1190
      %1192 = vmatmul.bf16.gmra.mxu0 %v452
      %v1193 = vpop.f32.mrf.mxu0
      %v1194 = vadd.f32 %v1135, %v1193
      %v1195 = vpop.f32.mrf.mxu0
      %v1196 = vadd.f32 %v1137, %v1195
      %1197 = vmatmul.bf16.gmra.mxu0 %v453
      %v1198 = vpop.f32.mrf.mxu0
      %v1199 = vadd.f32 %v1140, %v1198
      %v1200 = vpop.f32.mrf.mxu0
      %v1201 = vadd.f32 %v1142, %v1200
      %1202 = vmatmul.bf16.gmra.mxu0 %v454
      %v1203 = vpop.f32.mrf.mxu0
      %v1204 = vadd.f32 %v1145, %v1203
      %v1205 = vpop.f32.mrf.mxu0
      %v1206 = vadd.f32 %v1147, %v1205
      %1207 = vdwg.mxu0
      %s1208 = scalar_lea.vmem %s1, 384
      %v1209 = vld [vmem:[%s1208] sm:$0xf]
      %v1210 = vld [vmem:[%s1208 + $0x4] sm:$0xf]
      %v1211 = vld [vmem:[%s1208 + $0x8] sm:$0xf]
      %v1212 = vld [vmem:[%s1208 + $0xc] sm:$0xf]
      %v1213 = vld [vmem:[%s1208 + $0x10] sm:$0xf]
      %v1214 = vld [vmem:[%s1208 + $0x14] sm:$0xf]
      %v1215 = vld [vmem:[%s1208 + $0x18] sm:$0xf]
      %v1216 = vld [vmem:[%s1208 + $0x1c] sm:$0xf]
      %v1217 = vld [vmem:[%s1208 + $0x20] sm:$0xf]
      %v1218 = vld [vmem:[%s1208 + $0x24] sm:$0xf]
      %v1219 = vld [vmem:[%s1208 + $0x28] sm:$0xf]
      %v1220 = vld [vmem:[%s1208 + $0x2c] sm:$0xf]
      %v1221 = vld [vmem:[%s1208 + $0x30] sm:$0xf]
      %v1222 = vld [vmem:[%s1208 + $0x34] sm:$0xf]
      %v1223 = vld [vmem:[%s1208 + $0x38] sm:$0xf]
      %v1224 = vld [vmem:[%s1208 + $0x3c] sm:$0xf]
      %v1225 = vld [vmem:[%s1208 + $0x40] sm:$0xf]
      %v1226 = vld [vmem:[%s1208 + $0x44] sm:$0xf]
      %v1227 = vld [vmem:[%s1208 + $0x48] sm:$0xf]
      %v1228 = vld [vmem:[%s1208 + $0x4c] sm:$0xf]
      %v1229 = vld [vmem:[%s1208 + $0x50] sm:$0xf]
      %v1230 = vld [vmem:[%s1208 + $0x54] sm:$0xf]
      %v1231 = vld [vmem:[%s1208 + $0x58] sm:$0xf]
      %v1232 = vld [vmem:[%s1208 + $0x5c] sm:$0xf]
      %v1233 = vld [vmem:[%s1208 + $0x60] sm:$0xf]
      %v1234 = vld [vmem:[%s1208 + $0x64] sm:$0xf]
      %v1235 = vld [vmem:[%s1208 + $0x68] sm:$0xf]
      %v1236 = vld [vmem:[%s1208 + $0x6c] sm:$0xf]
      %v1237 = vld [vmem:[%s1208 + $0x70] sm:$0xf]
      %v1238 = vld [vmem:[%s1208 + $0x74] sm:$0xf]
      %v1239 = vld [vmem:[%s1208 + $0x78] sm:$0xf]
      %v1240 = vld [vmem:[%s1208 + $0x7c] sm:$0xf]
      %v1241 = vld [vmem:[%s1208 + $0x80] sm:$0xf]
      %v1242 = vld [vmem:[%s1208 + $0x84] sm:$0xf]
      %v1243 = vld [vmem:[%s1208 + $0x88] sm:$0xf]
      %v1244 = vld [vmem:[%s1208 + $0x8c] sm:$0xf]
      %v1245 = vld [vmem:[%s1208 + $0x90] sm:$0xf]
      %v1246 = vld [vmem:[%s1208 + $0x94] sm:$0xf]
      %v1247 = vld [vmem:[%s1208 + $0x98] sm:$0xf]
      %v1248 = vld [vmem:[%s1208 + $0x9c] sm:$0xf]
      %v1249 = vld [vmem:[%s1208 + $0xa0] sm:$0xf]
      %v1250 = vld [vmem:[%s1208 + $0xa4] sm:$0xf]
      %v1251 = vld [vmem:[%s1208 + $0xa8] sm:$0xf]
      %v1252 = vld [vmem:[%s1208 + $0xac] sm:$0xf]
      %v1253 = vld [vmem:[%s1208 + $0xb0] sm:$0xf]
      %v1254 = vld [vmem:[%s1208 + $0xb4] sm:$0xf]
      %v1255 = vld [vmem:[%s1208 + $0xb8] sm:$0xf]
      %v1256 = vld [vmem:[%s1208 + $0xbc] sm:$0xf]
      %v1305 = vunpack.c.l.b16 %v1209
      %v1306 = vunpack.c.l.b16 %v1210
      %v1307 = vunpack.c.l.b16 %v1211
      %v1308 = vunpack.c.l.b16 %v1212
      %v1309 = vunpack.c.l.b16 %v1213
      %v1310 = vunpack.c.l.b16 %v1214
      %v1311 = vunpack.c.l.b16 %v1215
      %v1312 = vunpack.c.l.b16 %v1216
      %v1313 = vunpack.c.l.b16 %v1217
      %v1314 = vunpack.c.l.b16 %v1218
      %v1315 = vunpack.c.l.b16 %v1219
      %v1316 = vunpack.c.l.b16 %v1220
      %v1317 = vunpack.c.l.b16 %v1221
      %v1318 = vunpack.c.l.b16 %v1222
      %v1319 = vunpack.c.l.b16 %v1223
      %v1320 = vunpack.c.l.b16 %v1224
      %v1321 = vunpack.c.l.b16 %v1225
      %v1322 = vunpack.c.l.b16 %v1226
      %v1323 = vunpack.c.l.b16 %v1227
      %v1324 = vunpack.c.l.b16 %v1228
      %v1325 = vunpack.c.l.b16 %v1229
      %v1326 = vunpack.c.l.b16 %v1230
      %v1327 = vunpack.c.l.b16 %v1231
      %v1328 = vunpack.c.l.b16 %v1232
      %v1329 = vunpack.c.l.b16 %v1233
      %v1330 = vunpack.c.l.b16 %v1234
      %v1331 = vunpack.c.l.b16 %v1235
      %v1332 = vunpack.c.l.b16 %v1236
      %v1333 = vunpack.c.l.b16 %v1237
      %v1334 = vunpack.c.l.b16 %v1238
      %v1335 = vunpack.c.l.b16 %v1239
      %v1336 = vunpack.c.l.b16 %v1240
      %v1337 = vunpack.c.l.b16 %v1241
      %v1338 = vunpack.c.l.b16 %v1242
      %v1339 = vunpack.c.l.b16 %v1243
      %v1340 = vunpack.c.l.b16 %v1244
      %v1341 = vunpack.c.l.b16 %v1245
      %v1342 = vunpack.c.l.b16 %v1246
      %v1343 = vunpack.c.l.b16 %v1247
      %v1344 = vunpack.c.l.b16 %v1248
      %v1345 = vunpack.c.l.b16 %v1249
      %v1346 = vunpack.c.l.b16 %v1250
      %v1347 = vunpack.c.l.b16 %v1251
      %v1348 = vunpack.c.l.b16 %v1252
      %v1349 = vunpack.c.l.b16 %v1253
      %v1350 = vunpack.c.l.b16 %v1254
      %v1351 = vunpack.c.l.b16 %v1255
      %v1352 = vunpack.c.l.b16 %v1256
      %v1353 = vpack.c.b16 %v1306, %v1305
      %v1354 = vpack.c.b16 %v1308, %v1307
      %v1355 = vpack.c.b16 %v1310, %v1309
      %v1356 = vpack.c.b16 %v1312, %v1311
      %v1357 = vpack.c.b16 %v1314, %v1313
      %v1358 = vpack.c.b16 %v1316, %v1315
      %v1359 = vpack.c.b16 %v1318, %v1317
      %v1360 = vpack.c.b16 %v1320, %v1319
      %v1361 = vpack.c.b16 %v1322, %v1321
      %v1362 = vpack.c.b16 %v1324, %v1323
      %v1363 = vpack.c.b16 %v1326, %v1325
      %v1364 = vpack.c.b16 %v1328, %v1327
      %v1365 = vpack.c.b16 %v1330, %v1329
      %v1366 = vpack.c.b16 %v1332, %v1331
      %v1367 = vpack.c.b16 %v1334, %v1333
      %v1368 = vpack.c.b16 %v1336, %v1335
      %v1369 = vpack.c.b16 %v1338, %v1337
      %v1370 = vpack.c.b16 %v1340, %v1339
      %v1371 = vpack.c.b16 %v1342, %v1341
      %v1372 = vpack.c.b16 %v1344, %v1343
      %v1373 = vpack.c.b16 %v1346, %v1345
      %v1374 = vpack.c.b16 %v1348, %v1347
      %v1375 = vpack.c.b16 %v1350, %v1349
      %v1376 = vpack.c.b16 %v1352, %v1351
      %1401 = vmatpush.bf16.msra.mxu0 %v1360
      %1402 = vmatpush.bf16.msra.mxu0 %v1359
      %1403 = vmatpush.bf16.msra.mxu0 %v1358
      %1404 = vmatpush.bf16.msra.mxu0 %v1357
      %1405 = vmatpush.bf16.msra.mxu0 %v1356
      %1406 = vmatpush.bf16.msra.mxu0 %v1355
      %1407 = vmatpush.bf16.msra.mxu0 %v1354
      %1408 = vmatpush.bf16.msra.mxu0 %v1353
      %1409 = vmatmul.bf16.gmra.mxu0 %v396
      %v1410 = vpop.f32.mrf.mxu0
      %v1411 = vadd.f32 0.0, %v1410
      %v1412 = vpop.f32.mrf.mxu0
      %v1413 = vadd.f32 0.0, %v1412
      %1414 = vmatmul.bf16.gmra.mxu0 %v397
      %v1415 = vpop.f32.mrf.mxu0
      %v1416 = vadd.f32 0.0, %v1415
      %v1417 = vpop.f32.mrf.mxu0
      %v1418 = vadd.f32 0.0, %v1417
      %1419 = vmatmul.bf16.gmra.mxu0 %v398
      %v1420 = vpop.f32.mrf.mxu0
      %v1421 = vadd.f32 0.0, %v1420
      %v1422 = vpop.f32.mrf.mxu0
      %v1423 = vadd.f32 0.0, %v1422
      %1424 = vmatmul.bf16.gmra.mxu0 %v399
      %v1425 = vpop.f32.mrf.mxu0
      %v1426 = vadd.f32 0.0, %v1425
      %v1427 = vpop.f32.mrf.mxu0
      %v1428 = vadd.f32 0.0, %v1427
      %1429 = vmatmul.bf16.gmra.mxu0 %v400
      %v1430 = vpop.f32.mrf.mxu0
      %v1431 = vadd.f32 0.0, %v1430
      %v1432 = vpop.f32.mrf.mxu0
      %v1433 = vadd.f32 0.0, %v1432
      %1434 = vmatmul.bf16.gmra.mxu0 %v401
      %v1435 = vpop.f32.mrf.mxu0
      %v1436 = vadd.f32 0.0, %v1435
      %v1437 = vpop.f32.mrf.mxu0
      %v1438 = vadd.f32 0.0, %v1437
      %1439 = vmatmul.bf16.gmra.mxu0 %v402
      %v1440 = vpop.f32.mrf.mxu0
      %v1441 = vadd.f32 0.0, %v1440
      %v1442 = vpop.f32.mrf.mxu0
      %v1443 = vadd.f32 0.0, %v1442
      %1444 = vmatmul.bf16.gmra.mxu0 %v403
      %v1445 = vpop.f32.mrf.mxu0
      %v1446 = vadd.f32 0.0, %v1445
      %v1447 = vpop.f32.mrf.mxu0
      %v1448 = vadd.f32 0.0, %v1447
      %1449 = vmatmul.bf16.gmra.mxu0 %v404
      %v1450 = vpop.f32.mrf.mxu0
      %v1451 = vadd.f32 0.0, %v1450
      %v1452 = vpop.f32.mrf.mxu0
      %v1453 = vadd.f32 0.0, %v1452
      %1454 = vmatmul.bf16.gmra.mxu0 %v405
      %v1455 = vpop.f32.mrf.mxu0
      %v1456 = vadd.f32 0.0, %v1455
      %v1457 = vpop.f32.mrf.mxu0
      %v1458 = vadd.f32 0.0, %v1457
      %1459 = vdwg.mxu0
      %1460 = vmatpush.bf16.msra.mxu0 %v1368
      %1461 = vmatpush.bf16.msra.mxu0 %v1367
      %1462 = vmatpush.bf16.msra.mxu0 %v1366
      %1463 = vmatpush.bf16.msra.mxu0 %v1365
      %1464 = vmatpush.bf16.msra.mxu0 %v1364
      %1465 = vmatpush.bf16.msra.mxu0 %v1363
      %1466 = vmatpush.bf16.msra.mxu0 %v1362
      %1467 = vmatpush.bf16.msra.mxu0 %v1361
      %1468 = vmatmul.bf16.gmra.mxu0 %v285
      %v1469 = vpop.f32.mrf.mxu0
      %v1470 = vadd.f32 %v1411, %v1469
      %v1471 = vpop.f32.mrf.mxu0
      %v1472 = vadd.f32 %v1413, %v1471
      %1473 = vmatmul.bf16.gmra.mxu0 %v286
      %v1474 = vpop.f32.mrf.mxu0
      %v1475 = vadd.f32 %v1416, %v1474
      %v1476 = vpop.f32.mrf.mxu0
      %v1477 = vadd.f32 %v1418, %v1476
      %1478 = vmatmul.bf16.gmra.mxu0 %v287
      %v1479 = vpop.f32.mrf.mxu0
      %v1480 = vadd.f32 %v1421, %v1479
      %v1481 = vpop.f32.mrf.mxu0
      %v1482 = vadd.f32 %v1423, %v1481
      %1483 = vmatmul.bf16.gmra.mxu0 %v288
      %v1484 = vpop.f32.mrf.mxu0
      %v1485 = vadd.f32 %v1426, %v1484
      %v1486 = vpop.f32.mrf.mxu0
      %v1487 = vadd.f32 %v1428, %v1486
      %1488 = vmatmul.bf16.gmra.mxu0 %v289
      %v1489 = vpop.f32.mrf.mxu0
      %v1490 = vadd.f32 %v1431, %v1489
      %v1491 = vpop.f32.mrf.mxu0
      %v1492 = vadd.f32 %v1433, %v1491
      %1493 = vmatmul.bf16.gmra.mxu0 %v290
      %v1494 = vpop.f32.mrf.mxu0
      %v1495 = vadd.f32 %v1436, %v1494
      %v1496 = vpop.f32.mrf.mxu0
      %v1497 = vadd.f32 %v1438, %v1496
      %1498 = vmatmul.bf16.gmra.mxu0 %v291
      %v1499 = vpop.f32.mrf.mxu0
      %v1500 = vadd.f32 %v1441, %v1499
      %v1501 = vpop.f32.mrf.mxu0
      %v1502 = vadd.f32 %v1443, %v1501
      %1503 = vmatmul.bf16.gmra.mxu0 %v292
      %v1504 = vpop.f32.mrf.mxu0
      %v1505 = vadd.f32 %v1446, %v1504
      %v1506 = vpop.f32.mrf.mxu0
      %v1507 = vadd.f32 %v1448, %v1506
      %1508 = vmatmul.bf16.gmra.mxu0 %v293
      %v1509 = vpop.f32.mrf.mxu0
      %v1510 = vadd.f32 %v1451, %v1509
      %v1511 = vpop.f32.mrf.mxu0
      %v1512 = vadd.f32 %v1453, %v1511
      %1513 = vmatmul.bf16.gmra.mxu0 %v294
      %v1514 = vpop.f32.mrf.mxu0
      %v1515 = vadd.f32 %v1456, %v1514
      %v1516 = vpop.f32.mrf.mxu0
      %v1517 = vadd.f32 %v1458, %v1516
      %1518 = vdwg.mxu0
      %1519 = vmatpush.bf16.msra.mxu0 %v1376
      %1520 = vmatpush.bf16.msra.mxu0 %v1375
      %1521 = vmatpush.bf16.msra.mxu0 %v1374
      %1522 = vmatpush.bf16.msra.mxu0 %v1373
      %1523 = vmatpush.bf16.msra.mxu0 %v1372
      %1524 = vmatpush.bf16.msra.mxu0 %v1371
      %1525 = vmatpush.bf16.msra.mxu0 %v1370
      %1526 = vmatpush.bf16.msra.mxu0 %v1369
      %1527 = vmatmul.bf16.gmra.mxu0 %v447
      %v1528 = vpop.f32.mrf.mxu0
      %v1529 = vadd.f32 %v1470, %v1528
      %v1530 = vpop.f32.mrf.mxu0
      %v1531 = vadd.f32 %v1472, %v1530
      %1532 = vmatmul.bf16.gmra.mxu0 %v448
      %v1533 = vpop.f32.mrf.mxu0
      %v1534 = vadd.f32 %v1475, %v1533
      %v1535 = vpop.f32.mrf.mxu0
      %v1536 = vadd.f32 %v1477, %v1535
      %1537 = vmatmul.bf16.gmra.mxu0 %v449
      %v1538 = vpop.f32.mrf.mxu0
      %v1539 = vadd.f32 %v1480, %v1538
      %v1540 = vpop.f32.mrf.mxu0
      %v1541 = vadd.f32 %v1482, %v1540
      %1542 = vmatmul.bf16.gmra.mxu0 %v450
      %v1543 = vpop.f32.mrf.mxu0
      %v1544 = vadd.f32 %v1485, %v1543
      %v1545 = vpop.f32.mrf.mxu0
      %v1546 = vadd.f32 %v1487, %v1545
      %1547 = vmatmul.bf16.gmra.mxu0 %v451
      %v1548 = vpop.f32.mrf.mxu0
      %v1549 = vadd.f32 %v1490, %v1548
      %v1550 = vpop.f32.mrf.mxu0
      %v1551 = vadd.f32 %v1492, %v1550
      %1552 = vmatmul.bf16.gmra.mxu0 %v452
      %v1553 = vpop.f32.mrf.mxu0
      %v1554 = vadd.f32 %v1495, %v1553
      %v1555 = vpop.f32.mrf.mxu0
      %v1556 = vadd.f32 %v1497, %v1555
      %1557 = vmatmul.bf16.gmra.mxu0 %v453
      %v1558 = vpop.f32.mrf.mxu0
      %v1559 = vadd.f32 %v1500, %v1558
      %v1560 = vpop.f32.mrf.mxu0
      %v1561 = vadd.f32 %v1502, %v1560
      %1562 = vmatmul.bf16.gmra.mxu0 %v454
      %v1563 = vpop.f32.mrf.mxu0
      %v1564 = vadd.f32 %v1505, %v1563
      %v1565 = vpop.f32.mrf.mxu0
      %v1566 = vadd.f32 %v1507, %v1565
      %1567 = vmatmul.bf16.gmra.mxu0 %v455
      %v1568 = vpop.f32.mrf.mxu0
      %v1569 = vadd.f32 %v1510, %v1568
      %v1570 = vpop.f32.mrf.mxu0
      %v1571 = vadd.f32 %v1512, %v1570
      %1572 = vmatmul.bf16.gmra.mxu0 %v456
      %v1573 = vpop.f32.mrf.mxu0
      %v1574 = vadd.f32 %v1515, %v1573
      %v1575 = vpop.f32.mrf.mxu0
      %v1576 = vadd.f32 %v1517, %v1575
      %1577 = vdwg.mxu0
      %v1578 = vadd.f32 %v1159, %v1529
      %v1579 = vadd.f32 %v1161, %v1531
      %v1580 = vadd.f32 %v1164, %v1534
      %v1581 = vadd.f32 %v1166, %v1536
      %v1582 = vadd.f32 %v1169, %v1539
      %v1583 = vadd.f32 %v1171, %v1541
      %v1584 = vadd.f32 %v1174, %v1544
      %v1585 = vadd.f32 %v1176, %v1546
      %v1586 = vadd.f32 %v1179, %v1549
      %v1587 = vadd.f32 %v1181, %v1551
      %v1588 = vadd.f32 %v1184, %v1554
      %v1589 = vadd.f32 %v1186, %v1556
      %v1590 = vadd.f32 %v1189, %v1559
      %v1591 = vadd.f32 %v1191, %v1561
      %v1592 = vadd.f32 %v1194, %v1564
      %v1593 = vadd.f32 %v1196, %v1566
      %v1594 = vadd.f32 %v1199, %v1569
      %v1595 = vadd.f32 %v1201, %v1571
      %v1596 = vadd.f32 %v1204, %v1574
      %v1597 = vadd.f32 %v1206, %v1576
      %v1598 = vmax.f32 %v1578, 0.0
      %v1599 = vmax.f32 %v1579, 0.0
      %v1600 = vmax.f32 %v1580, 0.0
      %v1601 = vmax.f32 %v1581, 0.0
      %v1602 = vmax.f32 %v1582, 0.0
      %v1603 = vmax.f32 %v1583, 0.0
      %v1604 = vmax.f32 %v1584, 0.0
      %v1605 = vmax.f32 %v1585, 0.0
      %v1606 = vmax.f32 %v1586, 0.0
      %v1607 = vmax.f32 %v1587, 0.0
      %v1608 = vmax.f32 %v1588, 0.0
      %v1609 = vmax.f32 %v1589, 0.0
      %v1610 = vmax.f32 %v1590, 0.0
      %v1611 = vmax.f32 %v1591, 0.0
      %v1612 = vmax.f32 %v1592, 0.0
      %v1613 = vmax.f32 %v1593, 0.0
      %v1614 = vmax.f32 %v1594, 0.0
      %v1615 = vmax.f32 %v1595, 0.0
      %v1616 = vmax.f32 %v1596, 0.0
      %v1617 = vmax.f32 %v1597, 0.0
      %s1618 = smul.u32 %s19, 8
      %s1619 = ssub.s32 %s1618, 1
      %v1620 = vstv %s1619
      %v1621 = vadd.s32 %v1620, 1
      %v1622 = vadd.s32 %v1620, 2
      %v1623 = vadd.s32 %v1620, 3
      %v1624 = vadd.s32 %v1620, 4
      %v1625 = vadd.s32 %v1620, 5
      %v1626 = vadd.s32 %v1620, 6
      %v1627 = vadd.s32 %v1620, 7
      %v1628 = vadd.s32 %v1620, 8
      %v1629 = vadd.s32 %v1620, 9
      %vm1630 = vcmp.ge.s32.totalorder %v1620, 0
      %vm1631 = vcmp.ge.s32.totalorder %v1621, 0
      %vm1632 = vcmp.ge.s32.totalorder %v1622, 0
      %vm1633 = vcmp.ge.s32.totalorder %v1623, 0
      %vm1634 = vcmp.ge.s32.totalorder %v1624, 0
      %vm1635 = vcmp.ge.s32.totalorder %v1625, 0
      %vm1636 = vcmp.ge.s32.totalorder %v1626, 0
      %vm1637 = vcmp.ge.s32.totalorder %v1627, 0
      %vm1638 = vcmp.ge.s32.totalorder %v1628, 0
      %vm1639 = vcmp.ge.s32.totalorder %v1629, 0
      %vm1640 = vcmp.lt.s32.totalorder %v1620, 16
      %vm1641 = vcmp.lt.s32.totalorder %v1621, 16
      %vm1642 = vcmp.lt.s32.totalorder %v1622, 16
      %vm1643 = vcmp.lt.s32.totalorder %v1623, 16
      %vm1644 = vcmp.lt.s32.totalorder %v1624, 16
      %vm1645 = vcmp.lt.s32.totalorder %v1625, 16
      %vm1646 = vcmp.lt.s32.totalorder %v1626, 16
      %vm1647 = vcmp.lt.s32.totalorder %v1627, 16
      %vm1648 = vcmp.lt.s32.totalorder %v1628, 16
      %vm1649 = vcmp.lt.s32.totalorder %v1629, 16
      %vm1650 = vmand %vm1630, %vm1640
      %vm1651 = vmand %vm1631, %vm1641
      %vm1652 = vmand %vm1632, %vm1642
      %vm1653 = vmand %vm1633, %vm1643
      %vm1654 = vmand %vm1634, %vm1644
      %vm1655 = vmand %vm1635, %vm1645
      %vm1656 = vmand %vm1636, %vm1646
      %vm1657 = vmand %vm1637, %vm1647
      %vm1658 = vmand %vm1638, %vm1648
      %vm1659 = vmand %vm1639, %vm1649
      %v1660 = vsel %vm1650, 1, 0
      %v1661 = vsel %vm1651, 1, 0
      %v1662 = vsel %vm1652, 1, 0
      %v1663 = vsel %vm1653, 1, 0
      %v1664 = vsel %vm1654, 1, 0
      %v1665 = vsel %vm1655, 1, 0
      %v1666 = vsel %vm1656, 1, 0
      %v1667 = vsel %vm1657, 1, 0
      %v1668 = vsel %vm1658, 1, 0
      %v1669 = vsel %vm1659, 1, 0
      %vm1670 = vcmp.eq.s32.totalorder %v1660, 1
      %vm1671 = vcmp.eq.s32.totalorder %v1661, 1
      %vm1672 = vcmp.eq.s32.totalorder %v1662, 1
      %vm1673 = vcmp.eq.s32.totalorder %v1663, 1
      %vm1674 = vcmp.eq.s32.totalorder %v1664, 1
      %vm1675 = vcmp.eq.s32.totalorder %v1665, 1
      %vm1676 = vcmp.eq.s32.totalorder %v1666, 1
      %vm1677 = vcmp.eq.s32.totalorder %v1667, 1
      %vm1678 = vcmp.eq.s32.totalorder %v1668, 1
      %vm1679 = vcmp.eq.s32.totalorder %v1669, 1
      %v1680 = vsel %vm1670, %v1598, 0.0
      %v1681 = vsel %vm1670, %v1599, 0.0
      %v1682 = vsel %vm1671, %v1600, 0.0
      %v1683 = vsel %vm1671, %v1601, 0.0
      %v1684 = vsel %vm1672, %v1602, 0.0
      %v1685 = vsel %vm1672, %v1603, 0.0
      %v1686 = vsel %vm1673, %v1604, 0.0
      %v1687 = vsel %vm1673, %v1605, 0.0
      %v1688 = vsel %vm1674, %v1606, 0.0
      %v1689 = vsel %vm1674, %v1607, 0.0
      %v1690 = vsel %vm1675, %v1608, 0.0
      %v1691 = vsel %vm1675, %v1609, 0.0
      %v1692 = vsel %vm1676, %v1610, 0.0
      %v1693 = vsel %vm1676, %v1611, 0.0
      %v1694 = vsel %vm1677, %v1612, 0.0
      %v1695 = vsel %vm1677, %v1613, 0.0
      %v1696 = vsel %vm1678, %v1614, 0.0
      %v1697 = vsel %vm1678, %v1615, 0.0
      %v1698 = vsel %vm1679, %v1616, 0.0
      %v1699 = vsel %vm1679, %v1617, 0.0
      %v1700 = vpack.c.bf16 %v1680, %v1680
      %v1701 = vpack.c.bf16 %v1681, %v1681
      %v1702 = vpack.c.bf16 %v1682, %v1682
      %v1703 = vpack.c.bf16 %v1683, %v1683
      %v1704 = vpack.c.bf16 %v1684, %v1684
      %v1705 = vpack.c.bf16 %v1685, %v1685
      %v1706 = vpack.c.bf16 %v1686, %v1686
      %v1707 = vpack.c.bf16 %v1687, %v1687
      %v1708 = vpack.c.bf16 %v1688, %v1688
      %v1709 = vpack.c.bf16 %v1689, %v1689
      %v1710 = vpack.c.bf16 %v1690, %v1690
      %v1711 = vpack.c.bf16 %v1691, %v1691
      %v1712 = vpack.c.bf16 %v1692, %v1692
      %v1713 = vpack.c.bf16 %v1693, %v1693
      %v1714 = vpack.c.bf16 %v1694, %v1694
      %v1715 = vpack.c.bf16 %v1695, %v1695
      %v1716 = vpack.c.bf16 %v1696, %v1696
      %v1717 = vpack.c.bf16 %v1697, %v1697
      %v1718 = vpack.c.bf16 %v1698, %v1698
      %v1719 = vpack.c.bf16 %v1699, %v1699
      %v1740 = vunpack.c.l.b16 %v1700
      %v1741 = vunpack.c.l.b16 %v1701
      %v1742 = vunpack.c.l.b16 %v1702
      %v1743 = vunpack.c.l.b16 %v1703
      %v1744 = vunpack.c.l.b16 %v1704
      %v1745 = vunpack.c.l.b16 %v1705
      %v1746 = vunpack.c.l.b16 %v1706
      %v1747 = vunpack.c.l.b16 %v1707
      %v1748 = vunpack.c.l.b16 %v1708
      %v1749 = vunpack.c.l.b16 %v1709
      %v1750 = vunpack.c.l.b16 %v1710
      %v1751 = vunpack.c.l.b16 %v1711
      %v1752 = vunpack.c.l.b16 %v1712
      %v1753 = vunpack.c.l.b16 %v1713
      %v1754 = vunpack.c.l.b16 %v1714
      %v1755 = vunpack.c.l.b16 %v1715
      %v1756 = vunpack.c.l.b16 %v1716
      %v1757 = vunpack.c.l.b16 %v1717
      %v1758 = vunpack.c.l.b16 %v1718
      %v1759 = vunpack.c.l.b16 %v1719
      %v1760 = vpack.c.b16 %v1741, %v1740
      %v1761 = vpack.c.b16 %v1743, %v1742
      %v1762 = vpack.c.b16 %v1745, %v1744
      %v1763 = vpack.c.b16 %v1747, %v1746
      %v1764 = vpack.c.b16 %v1749, %v1748
      %v1765 = vpack.c.b16 %v1751, %v1750
      %v1766 = vpack.c.b16 %v1753, %v1752
      %v1767 = vpack.c.b16 %v1755, %v1754
      %v1768 = vpack.c.b16 %v1757, %v1756
      %v1769 = vpack.c.b16 %v1759, %v1758
      %v1771 = vshrl.u32 %v1760, 16
      %v1773 = vrot.slane %v1771, 7
      %v1774 = vshll.u32 %v1760, 16
      %v1776 = vor.u32 %v1773, %v1774
      %v1778 = vshrl.u32 %v1761, 16
      %v1780 = vrot.slane %v1778, 7
      %v1781 = vshll.u32 %v1761, 16
      %v1783 = vor.u32 %v1780, %v1781
      %v1785 = vshrl.u32 %v1762, 16
      %v1787 = vrot.slane %v1785, 7
      %v1788 = vshll.u32 %v1762, 16
      %v1790 = vor.u32 %v1787, %v1788
      %v1792 = vshrl.u32 %v1763, 16
      %v1794 = vrot.slane %v1792, 7
      %v1795 = vshll.u32 %v1763, 16
      %v1797 = vor.u32 %v1794, %v1795
      %v1799 = vshrl.u32 %v1764, 16
      %v1801 = vrot.slane %v1799, 7
      %v1802 = vshll.u32 %v1764, 16
      %v1804 = vor.u32 %v1801, %v1802
      %v1806 = vshrl.u32 %v1765, 16
      %v1808 = vrot.slane %v1806, 7
      %v1809 = vshll.u32 %v1765, 16
      %v1811 = vor.u32 %v1808, %v1809
      %v1813 = vshrl.u32 %v1766, 16
      %v1815 = vrot.slane %v1813, 7
      %v1816 = vshll.u32 %v1766, 16
      %v1818 = vor.u32 %v1815, %v1816
      %v1820 = vshrl.u32 %v1767, 16
      %v1822 = vrot.slane %v1820, 7
      %v1823 = vshll.u32 %v1767, 16
      %v1825 = vor.u32 %v1822, %v1823
      %v1827 = vshrl.u32 %v1768, 16
      %v1829 = vrot.slane %v1827, 7
      %v1830 = vshll.u32 %v1768, 16
      %v1832 = vor.u32 %v1829, %v1830
      %v1834 = vshrl.u32 %v1769, 16
      %v1836 = vrot.slane %v1834, 7
      %v1837 = vshll.u32 %v1769, 16
      %v1839 = vor.u32 %v1836, %v1837
      %v1850 = vsel %vm393, 0, %v1776
      %v1851 = vsel %vm393, 0, %v1783
      %v1852 = vsel %vm393, 0, %v1790
      %v1853 = vsel %vm393, 0, %v1797
      %v1854 = vsel %vm393, 0, %v1804
      %v1855 = vsel %vm393, 0, %v1811
      %v1856 = vsel %vm393, 0, %v1818
      %v1857 = vsel %vm393, 0, %v1825
      %v1858 = vsel %vm393, 0, %v1832
      %v1859 = vsel %vm393, 0, %v1839
      %v1860 = vrot.slane %v1774, 1
      %v1861 = vor.u32 %v1771, %v1860
      %v1862 = vrot.slane %v1781, 1
      %v1863 = vor.u32 %v1778, %v1862
      %v1864 = vrot.slane %v1788, 1
      %v1865 = vor.u32 %v1785, %v1864
      %v1866 = vrot.slane %v1795, 1
      %v1867 = vor.u32 %v1792, %v1866
      %v1868 = vrot.slane %v1802, 1
      %v1869 = vor.u32 %v1799, %v1868
      %v1870 = vrot.slane %v1809, 1
      %v1871 = vor.u32 %v1806, %v1870
      %v1872 = vrot.slane %v1816, 1
      %v1873 = vor.u32 %v1813, %v1872
      %v1874 = vrot.slane %v1823, 1
      %v1875 = vor.u32 %v1820, %v1874
      %v1876 = vrot.slane %v1830, 1
      %v1877 = vor.u32 %v1827, %v1876
      %v1878 = vrot.slane %v1837, 1
      %v1879 = vor.u32 %v1834, %v1878
      %v1890 = vsel %vm444, %v1861, 0
      %v1891 = vsel %vm444, %v1863, 0
      %v1892 = vsel %vm444, %v1865, 0
      %v1893 = vsel %vm444, %v1867, 0
      %v1894 = vsel %vm444, %v1869, 0
      %v1895 = vsel %vm444, %v1871, 0
      %v1896 = vsel %vm444, %v1873, 0
      %v1897 = vsel %vm444, %v1875, 0
      %v1898 = vsel %vm444, %v1877, 0
      %v1899 = vsel %vm444, %v1879, 0
      %v1910 = vld [vmem:[%s2] sm:$0xf]
      %v1911 = vld [vmem:[%s2 + $0x4] sm:$0xf]
      %v1912 = vld [vmem:[%s2 + $0x8] sm:$0xf]
      %v1913 = vld [vmem:[%s2 + $0xc] sm:$0xf]
      %v1914 = vld [vmem:[%s2 + $0x10] sm:$0xf]
      %v1915 = vld [vmem:[%s2 + $0x14] sm:$0xf]
      %v1916 = vld [vmem:[%s2 + $0x18] sm:$0xf]
      %v1917 = vld [vmem:[%s2 + $0x1c] sm:$0xf]
      %v1918 = vld [vmem:[%s2 + $0x20] sm:$0xf]
      %v1919 = vld [vmem:[%s2 + $0x24] sm:$0xf]
      %v1920 = vld [vmem:[%s2 + $0x28] sm:$0xf]
      %v1921 = vld [vmem:[%s2 + $0x2c] sm:$0xf]
      %v1922 = vld [vmem:[%s2 + $0x30] sm:$0xf]
      %v1923 = vld [vmem:[%s2 + $0x34] sm:$0xf]
      %v1924 = vld [vmem:[%s2 + $0x38] sm:$0xf]
      %v1925 = vld [vmem:[%s2 + $0x3c] sm:$0xf]
      %v1926 = vld [vmem:[%s2 + $0x40] sm:$0xf]
      %v1927 = vld [vmem:[%s2 + $0x44] sm:$0xf]
      %v1928 = vld [vmem:[%s2 + $0x48] sm:$0xf]
      %v1929 = vld [vmem:[%s2 + $0x4c] sm:$0xf]
      %v1930 = vld [vmem:[%s2 + $0x50] sm:$0xf]
      %v1931 = vld [vmem:[%s2 + $0x54] sm:$0xf]
      %v1932 = vld [vmem:[%s2 + $0x58] sm:$0xf]
      %v1933 = vld [vmem:[%s2 + $0x5c] sm:$0xf]
      %v1934 = vld [vmem:[%s2 + $0x60] sm:$0xf]
      %v1935 = vld [vmem:[%s2 + $0x64] sm:$0xf]
      %v1936 = vld [vmem:[%s2 + $0x68] sm:$0xf]
      %v1937 = vld [vmem:[%s2 + $0x6c] sm:$0xf]
      %v1938 = vld [vmem:[%s2 + $0x70] sm:$0xf]
      %v1939 = vld [vmem:[%s2 + $0x74] sm:$0xf]
      %v1940 = vld [vmem:[%s2 + $0x78] sm:$0xf]
      %v1941 = vld [vmem:[%s2 + $0x7c] sm:$0xf]
      %v1942 = vld [vmem:[%s2 + $0x80] sm:$0xf]
      %v1943 = vld [vmem:[%s2 + $0x84] sm:$0xf]
      %v1944 = vld [vmem:[%s2 + $0x88] sm:$0xf]
      %v1945 = vld [vmem:[%s2 + $0x8c] sm:$0xf]
      %v1946 = vld [vmem:[%s2 + $0x90] sm:$0xf]
      %v1947 = vld [vmem:[%s2 + $0x94] sm:$0xf]
      %v1948 = vld [vmem:[%s2 + $0x98] sm:$0xf]
      %v1949 = vld [vmem:[%s2 + $0x9c] sm:$0xf]
      %v1950 = vld [vmem:[%s2 + $0xa0] sm:$0xf]
      %v1951 = vld [vmem:[%s2 + $0xa4] sm:$0xf]
      %v1952 = vld [vmem:[%s2 + $0xa8] sm:$0xf]
      %v1953 = vld [vmem:[%s2 + $0xac] sm:$0xf]
      %v1954 = vld [vmem:[%s2 + $0xb0] sm:$0xf]
      %v1955 = vld [vmem:[%s2 + $0xb4] sm:$0xf]
      %v1956 = vld [vmem:[%s2 + $0xb8] sm:$0xf]
      %v1957 = vld [vmem:[%s2 + $0xbc] sm:$0xf]
      %s1958 = scalar_lea.vmem %s2, 192
      %v1959 = vld [vmem:[%s1958] sm:$0xf]
      %v1960 = vld [vmem:[%s1958 + $0x4] sm:$0xf]
      %v1961 = vld [vmem:[%s1958 + $0x8] sm:$0xf]
      %v1962 = vld [vmem:[%s1958 + $0xc] sm:$0xf]
      %v1963 = vld [vmem:[%s1958 + $0x10] sm:$0xf]
      %v1964 = vld [vmem:[%s1958 + $0x14] sm:$0xf]
      %v1965 = vld [vmem:[%s1958 + $0x18] sm:$0xf]
      %v1966 = vld [vmem:[%s1958 + $0x1c] sm:$0xf]
      %v1967 = vld [vmem:[%s1958 + $0x20] sm:$0xf]
      %v1968 = vld [vmem:[%s1958 + $0x24] sm:$0xf]
      %v1969 = vld [vmem:[%s1958 + $0x28] sm:$0xf]
      %v1970 = vld [vmem:[%s1958 + $0x2c] sm:$0xf]
      %v1971 = vld [vmem:[%s1958 + $0x30] sm:$0xf]
      %v1972 = vld [vmem:[%s1958 + $0x34] sm:$0xf]
      %v1973 = vld [vmem:[%s1958 + $0x38] sm:$0xf]
      %v1974 = vld [vmem:[%s1958 + $0x3c] sm:$0xf]
      %v1975 = vld [vmem:[%s1958 + $0x40] sm:$0xf]
      %v1976 = vld [vmem:[%s1958 + $0x44] sm:$0xf]
      %v1977 = vld [vmem:[%s1958 + $0x48] sm:$0xf]
      %v1978 = vld [vmem:[%s1958 + $0x4c] sm:$0xf]
      %v1979 = vld [vmem:[%s1958 + $0x50] sm:$0xf]
      %v1980 = vld [vmem:[%s1958 + $0x54] sm:$0xf]
      %v1981 = vld [vmem:[%s1958 + $0x58] sm:$0xf]
      %v1982 = vld [vmem:[%s1958 + $0x5c] sm:$0xf]
      %v1983 = vld [vmem:[%s1958 + $0x60] sm:$0xf]
      %v1984 = vld [vmem:[%s1958 + $0x64] sm:$0xf]
      %v1985 = vld [vmem:[%s1958 + $0x68] sm:$0xf]
      %v1986 = vld [vmem:[%s1958 + $0x6c] sm:$0xf]
      %v1987 = vld [vmem:[%s1958 + $0x70] sm:$0xf]
      %v1988 = vld [vmem:[%s1958 + $0x74] sm:$0xf]
      %v1989 = vld [vmem:[%s1958 + $0x78] sm:$0xf]
      %v1990 = vld [vmem:[%s1958 + $0x7c] sm:$0xf]
      %v1991 = vld [vmem:[%s1958 + $0x80] sm:$0xf]
      %v1992 = vld [vmem:[%s1958 + $0x84] sm:$0xf]
      %v1993 = vld [vmem:[%s1958 + $0x88] sm:$0xf]
      %v1994 = vld [vmem:[%s1958 + $0x8c] sm:$0xf]
      %v1995 = vld [vmem:[%s1958 + $0x90] sm:$0xf]
      %v1996 = vld [vmem:[%s1958 + $0x94] sm:$0xf]
      %v1997 = vld [vmem:[%s1958 + $0x98] sm:$0xf]
      %v1998 = vld [vmem:[%s1958 + $0x9c] sm:$0xf]
      %v1999 = vld [vmem:[%s1958 + $0xa0] sm:$0xf]
      %v2000 = vld [vmem:[%s1958 + $0xa4] sm:$0xf]
      %v2001 = vld [vmem:[%s1958 + $0xa8] sm:$0xf]
      %v2002 = vld [vmem:[%s1958 + $0xac] sm:$0xf]
      %v2003 = vld [vmem:[%s1958 + $0xb0] sm:$0xf]
      %v2004 = vld [vmem:[%s1958 + $0xb4] sm:$0xf]
      %v2005 = vld [vmem:[%s1958 + $0xb8] sm:$0xf]
      %v2006 = vld [vmem:[%s1958 + $0xbc] sm:$0xf]
      %v2055 = vunpack.c.l.b16 %v1959
      %v2056 = vunpack.c.l.b16 %v1960
      %v2057 = vunpack.c.l.b16 %v1961
      %v2058 = vunpack.c.l.b16 %v1962
      %v2059 = vunpack.c.l.b16 %v1963
      %v2060 = vunpack.c.l.b16 %v1964
      %v2061 = vunpack.c.l.b16 %v1965
      %v2062 = vunpack.c.l.b16 %v1966
      %v2063 = vunpack.c.l.b16 %v1967
      %v2064 = vunpack.c.l.b16 %v1968
      %v2065 = vunpack.c.l.b16 %v1969
      %v2066 = vunpack.c.l.b16 %v1970
      %v2067 = vunpack.c.l.b16 %v1971
      %v2068 = vunpack.c.l.b16 %v1972
      %v2069 = vunpack.c.l.b16 %v1973
      %v2070 = vunpack.c.l.b16 %v1974
      %v2071 = vunpack.c.l.b16 %v1975
      %v2072 = vunpack.c.l.b16 %v1976
      %v2073 = vunpack.c.l.b16 %v1977
      %v2074 = vunpack.c.l.b16 %v1978
      %v2075 = vunpack.c.l.b16 %v1979
      %v2076 = vunpack.c.l.b16 %v1980
      %v2077 = vunpack.c.l.b16 %v1981
      %v2078 = vunpack.c.l.b16 %v1982
      %v2079 = vunpack.c.l.b16 %v1983
      %v2080 = vunpack.c.l.b16 %v1984
      %v2081 = vunpack.c.l.b16 %v1985
      %v2082 = vunpack.c.l.b16 %v1986
      %v2083 = vunpack.c.l.b16 %v1987
      %v2084 = vunpack.c.l.b16 %v1988
      %v2085 = vunpack.c.l.b16 %v1989
      %v2086 = vunpack.c.l.b16 %v1990
      %v2087 = vunpack.c.l.b16 %v1991
      %v2088 = vunpack.c.l.b16 %v1992
      %v2089 = vunpack.c.l.b16 %v1993
      %v2090 = vunpack.c.l.b16 %v1994
      %v2091 = vunpack.c.l.b16 %v1995
      %v2092 = vunpack.c.l.b16 %v1996
      %v2093 = vunpack.c.l.b16 %v1997
      %v2094 = vunpack.c.l.b16 %v1998
      %v2095 = vunpack.c.l.b16 %v1999
      %v2096 = vunpack.c.l.b16 %v2000
      %v2097 = vunpack.c.l.b16 %v2001
      %v2098 = vunpack.c.l.b16 %v2002
      %v2099 = vunpack.c.l.b16 %v2003
      %v2100 = vunpack.c.l.b16 %v2004
      %v2101 = vunpack.c.l.b16 %v2005
      %v2102 = vunpack.c.l.b16 %v2006
      %v2103 = vpack.c.b16 %v2056, %v2055
      %v2104 = vpack.c.b16 %v2058, %v2057
      %v2105 = vpack.c.b16 %v2060, %v2059
      %v2106 = vpack.c.b16 %v2062, %v2061
      %v2107 = vpack.c.b16 %v2064, %v2063
      %v2108 = vpack.c.b16 %v2066, %v2065
      %v2109 = vpack.c.b16 %v2068, %v2067
      %v2110 = vpack.c.b16 %v2070, %v2069
      %v2111 = vpack.c.b16 %v2072, %v2071
      %v2112 = vpack.c.b16 %v2074, %v2073
      %v2113 = vpack.c.b16 %v2076, %v2075
      %v2114 = vpack.c.b16 %v2078, %v2077
      %v2115 = vpack.c.b16 %v2080, %v2079
      %v2116 = vpack.c.b16 %v2082, %v2081
      %v2117 = vpack.c.b16 %v2084, %v2083
      %v2118 = vpack.c.b16 %v2086, %v2085
      %v2119 = vpack.c.b16 %v2088, %v2087
      %v2120 = vpack.c.b16 %v2090, %v2089
      %v2121 = vpack.c.b16 %v2092, %v2091
      %v2122 = vpack.c.b16 %v2094, %v2093
      %v2123 = vpack.c.b16 %v2096, %v2095
      %v2124 = vpack.c.b16 %v2098, %v2097
      %v2125 = vpack.c.b16 %v2100, %v2099
      %v2126 = vpack.c.b16 %v2102, %v2101
      %2151 = vmatpush.bf16.msra.mxu0 %v2110
      %2152 = vmatpush.bf16.msra.mxu0 %v2109
      %2153 = vmatpush.bf16.msra.mxu0 %v2108
      %2154 = vmatpush.bf16.msra.mxu0 %v2107
      %2155 = vmatpush.bf16.msra.mxu0 %v2106
      %2156 = vmatpush.bf16.msra.mxu0 %v2105
      %2157 = vmatpush.bf16.msra.mxu0 %v2104
      %2158 = vmatpush.bf16.msra.mxu0 %v2103
      %2159 = vmatmul.bf16.gmra.mxu0 %v1851
      %v2160 = vpop.f32.mrf.mxu0
      %v2161 = vadd.f32 0.0, %v2160
      %v2162 = vpop.f32.mrf.mxu0
      %v2163 = vadd.f32 0.0, %v2162
      %2164 = vmatmul.bf16.gmra.mxu0 %v1852
      %v2165 = vpop.f32.mrf.mxu0
      %v2166 = vadd.f32 0.0, %v2165
      %v2167 = vpop.f32.mrf.mxu0
      %v2168 = vadd.f32 0.0, %v2167
      %2169 = vmatmul.bf16.gmra.mxu0 %v1853
      %v2170 = vpop.f32.mrf.mxu0
      %v2171 = vadd.f32 0.0, %v2170
      %v2172 = vpop.f32.mrf.mxu0
      %v2173 = vadd.f32 0.0, %v2172
      %2174 = vmatmul.bf16.gmra.mxu0 %v1854
      %v2175 = vpop.f32.mrf.mxu0
      %v2176 = vadd.f32 0.0, %v2175
      %v2177 = vpop.f32.mrf.mxu0
      %v2178 = vadd.f32 0.0, %v2177
      %2179 = vmatmul.bf16.gmra.mxu0 %v1855
      %v2180 = vpop.f32.mrf.mxu0
      %v2181 = vadd.f32 0.0, %v2180
      %v2182 = vpop.f32.mrf.mxu0
      %v2183 = vadd.f32 0.0, %v2182
      %2184 = vmatmul.bf16.gmra.mxu0 %v1856
      %v2185 = vpop.f32.mrf.mxu0
      %v2186 = vadd.f32 0.0, %v2185
      %v2187 = vpop.f32.mrf.mxu0
      %v2188 = vadd.f32 0.0, %v2187
      %2189 = vmatmul.bf16.gmra.mxu0 %v1857
      %v2190 = vpop.f32.mrf.mxu0
      %v2191 = vadd.f32 0.0, %v2190
      %v2192 = vpop.f32.mrf.mxu0
      %v2193 = vadd.f32 0.0, %v2192
      %2194 = vmatmul.bf16.gmra.mxu0 %v1858
      %v2195 = vpop.f32.mrf.mxu0
      %v2196 = vadd.f32 0.0, %v2195
      %v2197 = vpop.f32.mrf.mxu0
      %v2198 = vadd.f32 0.0, %v2197
      %2199 = vdwg.mxu0
      %2200 = vmatpush.bf16.msra.mxu0 %v2118
      %2201 = vmatpush.bf16.msra.mxu0 %v2117
      %2202 = vmatpush.bf16.msra.mxu0 %v2116
      %2203 = vmatpush.bf16.msra.mxu0 %v2115
      %2204 = vmatpush.bf16.msra.mxu0 %v2114
      %2205 = vmatpush.bf16.msra.mxu0 %v2113
      %2206 = vmatpush.bf16.msra.mxu0 %v2112
      %2207 = vmatpush.bf16.msra.mxu0 %v2111
      %2208 = vmatmul.bf16.gmra.mxu0 %v1761
      %v2209 = vpop.f32.mrf.mxu0
      %v2210 = vadd.f32 %v2161, %v2209
      %v2211 = vpop.f32.mrf.mxu0
      %v2212 = vadd.f32 %v2163, %v2211
      %2213 = vmatmul.bf16.gmra.mxu0 %v1762
      %v2214 = vpop.f32.mrf.mxu0
      %v2215 = vadd.f32 %v2166, %v2214
      %v2216 = vpop.f32.mrf.mxu0
      %v2217 = vadd.f32 %v2168, %v2216
      %2218 = vmatmul.bf16.gmra.mxu0 %v1763
      %v2219 = vpop.f32.mrf.mxu0
      %v2220 = vadd.f32 %v2171, %v2219
      %v2221 = vpop.f32.mrf.mxu0
      %v2222 = vadd.f32 %v2173, %v2221
      %2223 = vmatmul.bf16.gmra.mxu0 %v1764
      %v2224 = vpop.f32.mrf.mxu0
      %v2225 = vadd.f32 %v2176, %v2224
      %v2226 = vpop.f32.mrf.mxu0
      %v2227 = vadd.f32 %v2178, %v2226
      %2228 = vmatmul.bf16.gmra.mxu0 %v1765
      %v2229 = vpop.f32.mrf.mxu0
      %v2230 = vadd.f32 %v2181, %v2229
      %v2231 = vpop.f32.mrf.mxu0
      %v2232 = vadd.f32 %v2183, %v2231
      %2233 = vmatmul.bf16.gmra.mxu0 %v1766
      %v2234 = vpop.f32.mrf.mxu0
      %v2235 = vadd.f32 %v2186, %v2234
      %v2236 = vpop.f32.mrf.mxu0
      %v2237 = vadd.f32 %v2188, %v2236
      %2238 = vmatmul.bf16.gmra.mxu0 %v1767
      %v2239 = vpop.f32.mrf.mxu0
      %v2240 = vadd.f32 %v2191, %v2239
      %v2241 = vpop.f32.mrf.mxu0
      %v2242 = vadd.f32 %v2193, %v2241
      %2243 = vmatmul.bf16.gmra.mxu0 %v1768
      %v2244 = vpop.f32.mrf.mxu0
      %v2245 = vadd.f32 %v2196, %v2244
      %v2246 = vpop.f32.mrf.mxu0
      %v2247 = vadd.f32 %v2198, %v2246
      %2248 = vdwg.mxu0
      %2249 = vmatpush.bf16.msra.mxu0 %v2126
      %2250 = vmatpush.bf16.msra.mxu0 %v2125
      %2251 = vmatpush.bf16.msra.mxu0 %v2124
      %2252 = vmatpush.bf16.msra.mxu0 %v2123
      %2253 = vmatpush.bf16.msra.mxu0 %v2122
      %2254 = vmatpush.bf16.msra.mxu0 %v2121
      %2255 = vmatpush.bf16.msra.mxu0 %v2120
      %2256 = vmatpush.bf16.msra.mxu0 %v2119
      %2257 = vmatmul.bf16.gmra.mxu0 %v1891
      %v2258 = vpop.f32.mrf.mxu0
      %v2259 = vadd.f32 %v2210, %v2258
      %v2260 = vpop.f32.mrf.mxu0
      %v2261 = vadd.f32 %v2212, %v2260
      %2262 = vmatmul.bf16.gmra.mxu0 %v1892
      %v2263 = vpop.f32.mrf.mxu0
      %v2264 = vadd.f32 %v2215, %v2263
      %v2265 = vpop.f32.mrf.mxu0
      %v2266 = vadd.f32 %v2217, %v2265
      %2267 = vmatmul.bf16.gmra.mxu0 %v1893
      %v2268 = vpop.f32.mrf.mxu0
      %v2269 = vadd.f32 %v2220, %v2268
      %v2270 = vpop.f32.mrf.mxu0
      %v2271 = vadd.f32 %v2222, %v2270
      %2272 = vmatmul.bf16.gmra.mxu0 %v1894
      %v2273 = vpop.f32.mrf.mxu0
      %v2274 = vadd.f32 %v2225, %v2273
      %v2275 = vpop.f32.mrf.mxu0
      %v2276 = vadd.f32 %v2227, %v2275
      %2277 = vmatmul.bf16.gmra.mxu0 %v1895
      %v2278 = vpop.f32.mrf.mxu0
      %v2279 = vadd.f32 %v2230, %v2278
      %v2280 = vpop.f32.mrf.mxu0
      %v2281 = vadd.f32 %v2232, %v2280
      %2282 = vmatmul.bf16.gmra.mxu0 %v1896
      %v2283 = vpop.f32.mrf.mxu0
      %v2284 = vadd.f32 %v2235, %v2283
      %v2285 = vpop.f32.mrf.mxu0
      %v2286 = vadd.f32 %v2237, %v2285
      %2287 = vmatmul.bf16.gmra.mxu0 %v1897
      %v2288 = vpop.f32.mrf.mxu0
      %v2289 = vadd.f32 %v2240, %v2288
      %v2290 = vpop.f32.mrf.mxu0
      %v2291 = vadd.f32 %v2242, %v2290
      %2292 = vmatmul.bf16.gmra.mxu0 %v1898
      %v2293 = vpop.f32.mrf.mxu0
      %v2294 = vadd.f32 %v2245, %v2293
      %v2295 = vpop.f32.mrf.mxu0
      %v2296 = vadd.f32 %v2247, %v2295
      %2297 = vdwg.mxu0
      %v2346 = vunpack.c.l.b16 %v1910
      %v2347 = vunpack.c.l.b16 %v1911
      %v2348 = vunpack.c.l.b16 %v1912
      %v2349 = vunpack.c.l.b16 %v1913
      %v2350 = vunpack.c.l.b16 %v1914
      %v2351 = vunpack.c.l.b16 %v1915
      %v2352 = vunpack.c.l.b16 %v1916
      %v2353 = vunpack.c.l.b16 %v1917
      %v2354 = vunpack.c.l.b16 %v1918
      %v2355 = vunpack.c.l.b16 %v1919
      %v2356 = vunpack.c.l.b16 %v1920
      %v2357 = vunpack.c.l.b16 %v1921
      %v2358 = vunpack.c.l.b16 %v1922
      %v2359 = vunpack.c.l.b16 %v1923
      %v2360 = vunpack.c.l.b16 %v1924
      %v2361 = vunpack.c.l.b16 %v1925
      %v2362 = vunpack.c.l.b16 %v1926
      %v2363 = vunpack.c.l.b16 %v1927
      %v2364 = vunpack.c.l.b16 %v1928
      %v2365 = vunpack.c.l.b16 %v1929
      %v2366 = vunpack.c.l.b16 %v1930
      %v2367 = vunpack.c.l.b16 %v1931
      %v2368 = vunpack.c.l.b16 %v1932
      %v2369 = vunpack.c.l.b16 %v1933
      %v2370 = vunpack.c.l.b16 %v1934
      %v2371 = vunpack.c.l.b16 %v1935
      %v2372 = vunpack.c.l.b16 %v1936
      %v2373 = vunpack.c.l.b16 %v1937
      %v2374 = vunpack.c.l.b16 %v1938
      %v2375 = vunpack.c.l.b16 %v1939
      %v2376 = vunpack.c.l.b16 %v1940
      %v2377 = vunpack.c.l.b16 %v1941
      %v2378 = vunpack.c.l.b16 %v1942
      %v2379 = vunpack.c.l.b16 %v1943
      %v2380 = vunpack.c.l.b16 %v1944
      %v2381 = vunpack.c.l.b16 %v1945
      %v2382 = vunpack.c.l.b16 %v1946
      %v2383 = vunpack.c.l.b16 %v1947
      %v2384 = vunpack.c.l.b16 %v1948
      %v2385 = vunpack.c.l.b16 %v1949
      %v2386 = vunpack.c.l.b16 %v1950
      %v2387 = vunpack.c.l.b16 %v1951
      %v2388 = vunpack.c.l.b16 %v1952
      %v2389 = vunpack.c.l.b16 %v1953
      %v2390 = vunpack.c.l.b16 %v1954
      %v2391 = vunpack.c.l.b16 %v1955
      %v2392 = vunpack.c.l.b16 %v1956
      %v2393 = vunpack.c.l.b16 %v1957
      %v2394 = vpack.c.b16 %v2347, %v2346
      %v2395 = vpack.c.b16 %v2349, %v2348
      %v2396 = vpack.c.b16 %v2351, %v2350
      %v2397 = vpack.c.b16 %v2353, %v2352
      %v2398 = vpack.c.b16 %v2355, %v2354
      %v2399 = vpack.c.b16 %v2357, %v2356
      %v2400 = vpack.c.b16 %v2359, %v2358
      %v2401 = vpack.c.b16 %v2361, %v2360
      %v2402 = vpack.c.b16 %v2363, %v2362
      %v2403 = vpack.c.b16 %v2365, %v2364
      %v2404 = vpack.c.b16 %v2367, %v2366
      %v2405 = vpack.c.b16 %v2369, %v2368
      %v2406 = vpack.c.b16 %v2371, %v2370
      %v2407 = vpack.c.b16 %v2373, %v2372
      %v2408 = vpack.c.b16 %v2375, %v2374
      %v2409 = vpack.c.b16 %v2377, %v2376
      %v2410 = vpack.c.b16 %v2379, %v2378
      %v2411 = vpack.c.b16 %v2381, %v2380
      %v2412 = vpack.c.b16 %v2383, %v2382
      %v2413 = vpack.c.b16 %v2385, %v2384
      %v2414 = vpack.c.b16 %v2387, %v2386
      %v2415 = vpack.c.b16 %v2389, %v2388
      %v2416 = vpack.c.b16 %v2391, %v2390
      %v2417 = vpack.c.b16 %v2393, %v2392
      %2442 = vmatpush.bf16.msra.mxu0 %v2401
      %2443 = vmatpush.bf16.msra.mxu0 %v2400
      %2444 = vmatpush.bf16.msra.mxu0 %v2399
      %2445 = vmatpush.bf16.msra.mxu0 %v2398
      %2446 = vmatpush.bf16.msra.mxu0 %v2397
      %2447 = vmatpush.bf16.msra.mxu0 %v2396
      %2448 = vmatpush.bf16.msra.mxu0 %v2395
      %2449 = vmatpush.bf16.msra.mxu0 %v2394
      %2450 = vmatmul.bf16.gmra.mxu0 %v1850
      %v2451 = vpop.f32.mrf.mxu0
      %v2452 = vadd.f32 %v2259, %v2451
      %v2453 = vpop.f32.mrf.mxu0
      %v2454 = vadd.f32 %v2261, %v2453
      %2455 = vmatmul.bf16.gmra.mxu0 %v1851
      %v2456 = vpop.f32.mrf.mxu0
      %v2457 = vadd.f32 %v2264, %v2456
      %v2458 = vpop.f32.mrf.mxu0
      %v2459 = vadd.f32 %v2266, %v2458
      %2460 = vmatmul.bf16.gmra.mxu0 %v1852
      %v2461 = vpop.f32.mrf.mxu0
      %v2462 = vadd.f32 %v2269, %v2461
      %v2463 = vpop.f32.mrf.mxu0
      %v2464 = vadd.f32 %v2271, %v2463
      %2465 = vmatmul.bf16.gmra.mxu0 %v1853
      %v2466 = vpop.f32.mrf.mxu0
      %v2467 = vadd.f32 %v2274, %v2466
      %v2468 = vpop.f32.mrf.mxu0
      %v2469 = vadd.f32 %v2276, %v2468
      %2470 = vmatmul.bf16.gmra.mxu0 %v1854
      %v2471 = vpop.f32.mrf.mxu0
      %v2472 = vadd.f32 %v2279, %v2471
      %v2473 = vpop.f32.mrf.mxu0
      %v2474 = vadd.f32 %v2281, %v2473
      %2475 = vmatmul.bf16.gmra.mxu0 %v1855
      %v2476 = vpop.f32.mrf.mxu0
      %v2477 = vadd.f32 %v2284, %v2476
      %v2478 = vpop.f32.mrf.mxu0
      %v2479 = vadd.f32 %v2286, %v2478
      %2480 = vmatmul.bf16.gmra.mxu0 %v1856
      %v2481 = vpop.f32.mrf.mxu0
      %v2482 = vadd.f32 %v2289, %v2481
      %v2483 = vpop.f32.mrf.mxu0
      %v2484 = vadd.f32 %v2291, %v2483
      %2485 = vmatmul.bf16.gmra.mxu0 %v1857
      %v2486 = vpop.f32.mrf.mxu0
      %v2487 = vadd.f32 %v2294, %v2486
      %v2488 = vpop.f32.mrf.mxu0
      %v2489 = vadd.f32 %v2296, %v2488
      %2490 = vdwg.mxu0
      %2491 = vmatpush.bf16.msra.mxu0 %v2409
      %2492 = vmatpush.bf16.msra.mxu0 %v2408
      %2493 = vmatpush.bf16.msra.mxu0 %v2407
      %2494 = vmatpush.bf16.msra.mxu0 %v2406
      %2495 = vmatpush.bf16.msra.mxu0 %v2405
      %2496 = vmatpush.bf16.msra.mxu0 %v2404
      %2497 = vmatpush.bf16.msra.mxu0 %v2403
      %2498 = vmatpush.bf16.msra.mxu0 %v2402
      %2499 = vmatmul.bf16.gmra.mxu0 %v1760
      %v2500 = vpop.f32.mrf.mxu0
      %v2501 = vadd.f32 %v2452, %v2500
      %v2502 = vpop.f32.mrf.mxu0
      %v2503 = vadd.f32 %v2454, %v2502
      %2504 = vmatmul.bf16.gmra.mxu0 %v1761
      %v2505 = vpop.f32.mrf.mxu0
      %v2506 = vadd.f32 %v2457, %v2505
      %v2507 = vpop.f32.mrf.mxu0
      %v2508 = vadd.f32 %v2459, %v2507
      %2509 = vmatmul.bf16.gmra.mxu0 %v1762
      %v2510 = vpop.f32.mrf.mxu0
      %v2511 = vadd.f32 %v2462, %v2510
      %v2512 = vpop.f32.mrf.mxu0
      %v2513 = vadd.f32 %v2464, %v2512
      %2514 = vmatmul.bf16.gmra.mxu0 %v1763
      %v2515 = vpop.f32.mrf.mxu0
      %v2516 = vadd.f32 %v2467, %v2515
      %v2517 = vpop.f32.mrf.mxu0
      %v2518 = vadd.f32 %v2469, %v2517
      %2519 = vmatmul.bf16.gmra.mxu0 %v1764
      %v2520 = vpop.f32.mrf.mxu0
      %v2521 = vadd.f32 %v2472, %v2520
      %v2522 = vpop.f32.mrf.mxu0
      %v2523 = vadd.f32 %v2474, %v2522
      %2524 = vmatmul.bf16.gmra.mxu0 %v1765
      %v2525 = vpop.f32.mrf.mxu0
      %v2526 = vadd.f32 %v2477, %v2525
      %v2527 = vpop.f32.mrf.mxu0
      %v2528 = vadd.f32 %v2479, %v2527
      %2529 = vmatmul.bf16.gmra.mxu0 %v1766
      %v2530 = vpop.f32.mrf.mxu0
      %v2531 = vadd.f32 %v2482, %v2530
      %v2532 = vpop.f32.mrf.mxu0
      %v2533 = vadd.f32 %v2484, %v2532
      %2534 = vmatmul.bf16.gmra.mxu0 %v1767
      %v2535 = vpop.f32.mrf.mxu0
      %v2536 = vadd.f32 %v2487, %v2535
      %v2537 = vpop.f32.mrf.mxu0
      %v2538 = vadd.f32 %v2489, %v2537
      %2539 = vdwg.mxu0
      %2540 = vmatpush.bf16.msra.mxu0 %v2417
      %2541 = vmatpush.bf16.msra.mxu0 %v2416
      %2542 = vmatpush.bf16.msra.mxu0 %v2415
      %2543 = vmatpush.bf16.msra.mxu0 %v2414
      %2544 = vmatpush.bf16.msra.mxu0 %v2413
      %2545 = vmatpush.bf16.msra.mxu0 %v2412
      %2546 = vmatpush.bf16.msra.mxu0 %v2411
      %2547 = vmatpush.bf16.msra.mxu0 %v2410
      %2548 = vmatmul.bf16.gmra.mxu0 %v1890
      %v2549 = vpop.f32.mrf.mxu0
      %v2550 = vadd.f32 %v2501, %v2549
      %v2551 = vpop.f32.mrf.mxu0
      %v2552 = vadd.f32 %v2503, %v2551
      %2553 = vmatmul.bf16.gmra.mxu0 %v1891
      %v2554 = vpop.f32.mrf.mxu0
      %v2555 = vadd.f32 %v2506, %v2554
      %v2556 = vpop.f32.mrf.mxu0
      %v2557 = vadd.f32 %v2508, %v2556
      %2558 = vmatmul.bf16.gmra.mxu0 %v1892
      %v2559 = vpop.f32.mrf.mxu0
      %v2560 = vadd.f32 %v2511, %v2559
      %v2561 = vpop.f32.mrf.mxu0
      %v2562 = vadd.f32 %v2513, %v2561
      %2563 = vmatmul.bf16.gmra.mxu0 %v1893
      %v2564 = vpop.f32.mrf.mxu0
      %v2565 = vadd.f32 %v2516, %v2564
      %v2566 = vpop.f32.mrf.mxu0
      %v2567 = vadd.f32 %v2518, %v2566
      %2568 = vmatmul.bf16.gmra.mxu0 %v1894
      %v2569 = vpop.f32.mrf.mxu0
      %v2570 = vadd.f32 %v2521, %v2569
      %v2571 = vpop.f32.mrf.mxu0
      %v2572 = vadd.f32 %v2523, %v2571
      %2573 = vmatmul.bf16.gmra.mxu0 %v1895
      %v2574 = vpop.f32.mrf.mxu0
      %v2575 = vadd.f32 %v2526, %v2574
      %v2576 = vpop.f32.mrf.mxu0
      %v2577 = vadd.f32 %v2528, %v2576
      %2578 = vmatmul.bf16.gmra.mxu0 %v1896
      %v2579 = vpop.f32.mrf.mxu0
      %v2580 = vadd.f32 %v2531, %v2579
      %v2581 = vpop.f32.mrf.mxu0
      %v2582 = vadd.f32 %v2533, %v2581
      %2583 = vmatmul.bf16.gmra.mxu0 %v1897
      %v2584 = vpop.f32.mrf.mxu0
      %v2585 = vadd.f32 %v2536, %v2584
      %v2586 = vpop.f32.mrf.mxu0
      %v2587 = vadd.f32 %v2538, %v2586
      %2588 = vdwg.mxu0
      %s2589 = scalar_lea.vmem %s2, 384
      %v2590 = vld [vmem:[%s2589] sm:$0xf]
      %v2591 = vld [vmem:[%s2589 + $0x4] sm:$0xf]
      %v2592 = vld [vmem:[%s2589 + $0x8] sm:$0xf]
      %v2593 = vld [vmem:[%s2589 + $0xc] sm:$0xf]
      %v2594 = vld [vmem:[%s2589 + $0x10] sm:$0xf]
      %v2595 = vld [vmem:[%s2589 + $0x14] sm:$0xf]
      %v2596 = vld [vmem:[%s2589 + $0x18] sm:$0xf]
      %v2597 = vld [vmem:[%s2589 + $0x1c] sm:$0xf]
      %v2598 = vld [vmem:[%s2589 + $0x20] sm:$0xf]
      %v2599 = vld [vmem:[%s2589 + $0x24] sm:$0xf]
      %v2600 = vld [vmem:[%s2589 + $0x28] sm:$0xf]
      %v2601 = vld [vmem:[%s2589 + $0x2c] sm:$0xf]
      %v2602 = vld [vmem:[%s2589 + $0x30] sm:$0xf]
      %v2603 = vld [vmem:[%s2589 + $0x34] sm:$0xf]
      %v2604 = vld [vmem:[%s2589 + $0x38] sm:$0xf]
      %v2605 = vld [vmem:[%s2589 + $0x3c] sm:$0xf]
      %v2606 = vld [vmem:[%s2589 + $0x40] sm:$0xf]
      %v2607 = vld [vmem:[%s2589 + $0x44] sm:$0xf]
      %v2608 = vld [vmem:[%s2589 + $0x48] sm:$0xf]
      %v2609 = vld [vmem:[%s2589 + $0x4c] sm:$0xf]
      %v2610 = vld [vmem:[%s2589 + $0x50] sm:$0xf]
      %v2611 = vld [vmem:[%s2589 + $0x54] sm:$0xf]
      %v2612 = vld [vmem:[%s2589 + $0x58] sm:$0xf]
      %v2613 = vld [vmem:[%s2589 + $0x5c] sm:$0xf]
      %v2614 = vld [vmem:[%s2589 + $0x60] sm:$0xf]
      %v2615 = vld [vmem:[%s2589 + $0x64] sm:$0xf]
      %v2616 = vld [vmem:[%s2589 + $0x68] sm:$0xf]
      %v2617 = vld [vmem:[%s2589 + $0x6c] sm:$0xf]
      %v2618 = vld [vmem:[%s2589 + $0x70] sm:$0xf]
      %v2619 = vld [vmem:[%s2589 + $0x74] sm:$0xf]
      %v2620 = vld [vmem:[%s2589 + $0x78] sm:$0xf]
      %v2621 = vld [vmem:[%s2589 + $0x7c] sm:$0xf]
      %v2622 = vld [vmem:[%s2589 + $0x80] sm:$0xf]
      %v2623 = vld [vmem:[%s2589 + $0x84] sm:$0xf]
      %v2624 = vld [vmem:[%s2589 + $0x88] sm:$0xf]
      %v2625 = vld [vmem:[%s2589 + $0x8c] sm:$0xf]
      %v2626 = vld [vmem:[%s2589 + $0x90] sm:$0xf]
      %v2627 = vld [vmem:[%s2589 + $0x94] sm:$0xf]
      %v2628 = vld [vmem:[%s2589 + $0x98] sm:$0xf]
      %v2629 = vld [vmem:[%s2589 + $0x9c] sm:$0xf]
      %v2630 = vld [vmem:[%s2589 + $0xa0] sm:$0xf]
      %v2631 = vld [vmem:[%s2589 + $0xa4] sm:$0xf]
      %v2632 = vld [vmem:[%s2589 + $0xa8] sm:$0xf]
      %v2633 = vld [vmem:[%s2589 + $0xac] sm:$0xf]
      %v2634 = vld [vmem:[%s2589 + $0xb0] sm:$0xf]
      %v2635 = vld [vmem:[%s2589 + $0xb4] sm:$0xf]
      %v2636 = vld [vmem:[%s2589 + $0xb8] sm:$0xf]
      %v2637 = vld [vmem:[%s2589 + $0xbc] sm:$0xf]
      %v2686 = vunpack.c.l.b16 %v2590
      %v2687 = vunpack.c.l.b16 %v2591
      %v2688 = vunpack.c.l.b16 %v2592
      %v2689 = vunpack.c.l.b16 %v2593
      %v2690 = vunpack.c.l.b16 %v2594
      %v2691 = vunpack.c.l.b16 %v2595
      %v2692 = vunpack.c.l.b16 %v2596
      %v2693 = vunpack.c.l.b16 %v2597
      %v2694 = vunpack.c.l.b16 %v2598
      %v2695 = vunpack.c.l.b16 %v2599
      %v2696 = vunpack.c.l.b16 %v2600
      %v2697 = vunpack.c.l.b16 %v2601
      %v2698 = vunpack.c.l.b16 %v2602
      %v2699 = vunpack.c.l.b16 %v2603
      %v2700 = vunpack.c.l.b16 %v2604
      %v2701 = vunpack.c.l.b16 %v2605
      %v2702 = vunpack.c.l.b16 %v2606
      %v2703 = vunpack.c.l.b16 %v2607
      %v2704 = vunpack.c.l.b16 %v2608
      %v2705 = vunpack.c.l.b16 %v2609
      %v2706 = vunpack.c.l.b16 %v2610
      %v2707 = vunpack.c.l.b16 %v2611
      %v2708 = vunpack.c.l.b16 %v2612
      %v2709 = vunpack.c.l.b16 %v2613
      %v2710 = vunpack.c.l.b16 %v2614
      %v2711 = vunpack.c.l.b16 %v2615
      %v2712 = vunpack.c.l.b16 %v2616
      %v2713 = vunpack.c.l.b16 %v2617
      %v2714 = vunpack.c.l.b16 %v2618
      %v2715 = vunpack.c.l.b16 %v2619
      %v2716 = vunpack.c.l.b16 %v2620
      %v2717 = vunpack.c.l.b16 %v2621
      %v2718 = vunpack.c.l.b16 %v2622
      %v2719 = vunpack.c.l.b16 %v2623
      %v2720 = vunpack.c.l.b16 %v2624
      %v2721 = vunpack.c.l.b16 %v2625
      %v2722 = vunpack.c.l.b16 %v2626
      %v2723 = vunpack.c.l.b16 %v2627
      %v2724 = vunpack.c.l.b16 %v2628
      %v2725 = vunpack.c.l.b16 %v2629
      %v2726 = vunpack.c.l.b16 %v2630
      %v2727 = vunpack.c.l.b16 %v2631
      %v2728 = vunpack.c.l.b16 %v2632
      %v2729 = vunpack.c.l.b16 %v2633
      %v2730 = vunpack.c.l.b16 %v2634
      %v2731 = vunpack.c.l.b16 %v2635
      %v2732 = vunpack.c.l.b16 %v2636
      %v2733 = vunpack.c.l.b16 %v2637
      %v2734 = vpack.c.b16 %v2687, %v2686
      %v2735 = vpack.c.b16 %v2689, %v2688
      %v2736 = vpack.c.b16 %v2691, %v2690
      %v2737 = vpack.c.b16 %v2693, %v2692
      %v2738 = vpack.c.b16 %v2695, %v2694
      %v2739 = vpack.c.b16 %v2697, %v2696
      %v2740 = vpack.c.b16 %v2699, %v2698
      %v2741 = vpack.c.b16 %v2701, %v2700
      %v2742 = vpack.c.b16 %v2703, %v2702
      %v2743 = vpack.c.b16 %v2705, %v2704
      %v2744 = vpack.c.b16 %v2707, %v2706
      %v2745 = vpack.c.b16 %v2709, %v2708
      %v2746 = vpack.c.b16 %v2711, %v2710
      %v2747 = vpack.c.b16 %v2713, %v2712
      %v2748 = vpack.c.b16 %v2715, %v2714
      %v2749 = vpack.c.b16 %v2717, %v2716
      %v2750 = vpack.c.b16 %v2719, %v2718
      %v2751 = vpack.c.b16 %v2721, %v2720
      %v2752 = vpack.c.b16 %v2723, %v2722
      %v2753 = vpack.c.b16 %v2725, %v2724
      %v2754 = vpack.c.b16 %v2727, %v2726
      %v2755 = vpack.c.b16 %v2729, %v2728
      %v2756 = vpack.c.b16 %v2731, %v2730
      %v2757 = vpack.c.b16 %v2733, %v2732
      %2782 = vmatpush.bf16.msra.mxu0 %v2741
      %2783 = vmatpush.bf16.msra.mxu0 %v2740
      %2784 = vmatpush.bf16.msra.mxu0 %v2739
      %2785 = vmatpush.bf16.msra.mxu0 %v2738
      %2786 = vmatpush.bf16.msra.mxu0 %v2737
      %2787 = vmatpush.bf16.msra.mxu0 %v2736
      %2788 = vmatpush.bf16.msra.mxu0 %v2735
      %2789 = vmatpush.bf16.msra.mxu0 %v2734
      %2790 = vmatmul.bf16.gmra.mxu0 %v1852
      %v2791 = vpop.f32.mrf.mxu0
      %v2792 = vadd.f32 0.0, %v2791
      %v2793 = vpop.f32.mrf.mxu0
      %v2794 = vadd.f32 0.0, %v2793
      %2795 = vmatmul.bf16.gmra.mxu0 %v1853
      %v2796 = vpop.f32.mrf.mxu0
      %v2797 = vadd.f32 0.0, %v2796
      %v2798 = vpop.f32.mrf.mxu0
      %v2799 = vadd.f32 0.0, %v2798
      %2800 = vmatmul.bf16.gmra.mxu0 %v1854
      %v2801 = vpop.f32.mrf.mxu0
      %v2802 = vadd.f32 0.0, %v2801
      %v2803 = vpop.f32.mrf.mxu0
      %v2804 = vadd.f32 0.0, %v2803
      %2805 = vmatmul.bf16.gmra.mxu0 %v1855
      %v2806 = vpop.f32.mrf.mxu0
      %v2807 = vadd.f32 0.0, %v2806
      %v2808 = vpop.f32.mrf.mxu0
      %v2809 = vadd.f32 0.0, %v2808
      %2810 = vmatmul.bf16.gmra.mxu0 %v1856
      %v2811 = vpop.f32.mrf.mxu0
      %v2812 = vadd.f32 0.0, %v2811
      %v2813 = vpop.f32.mrf.mxu0
      %v2814 = vadd.f32 0.0, %v2813
      %2815 = vmatmul.bf16.gmra.mxu0 %v1857
      %v2816 = vpop.f32.mrf.mxu0
      %v2817 = vadd.f32 0.0, %v2816
      %v2818 = vpop.f32.mrf.mxu0
      %v2819 = vadd.f32 0.0, %v2818
      %2820 = vmatmul.bf16.gmra.mxu0 %v1858
      %v2821 = vpop.f32.mrf.mxu0
      %v2822 = vadd.f32 0.0, %v2821
      %v2823 = vpop.f32.mrf.mxu0
      %v2824 = vadd.f32 0.0, %v2823
      %2825 = vmatmul.bf16.gmra.mxu0 %v1859
      %v2826 = vpop.f32.mrf.mxu0
      %v2827 = vadd.f32 0.0, %v2826
      %v2828 = vpop.f32.mrf.mxu0
      %v2829 = vadd.f32 0.0, %v2828
      %2830 = vdwg.mxu0
      %2831 = vmatpush.bf16.msra.mxu0 %v2749
      %2832 = vmatpush.bf16.msra.mxu0 %v2748
      %2833 = vmatpush.bf16.msra.mxu0 %v2747
      %2834 = vmatpush.bf16.msra.mxu0 %v2746
      %2835 = vmatpush.bf16.msra.mxu0 %v2745
      %2836 = vmatpush.bf16.msra.mxu0 %v2744
      %2837 = vmatpush.bf16.msra.mxu0 %v2743
      %2838 = vmatpush.bf16.msra.mxu0 %v2742
      %2839 = vmatmul.bf16.gmra.mxu0 %v1762
      %v2840 = vpop.f32.mrf.mxu0
      %v2841 = vadd.f32 %v2792, %v2840
      %v2842 = vpop.f32.mrf.mxu0
      %v2843 = vadd.f32 %v2794, %v2842
      %2844 = vmatmul.bf16.gmra.mxu0 %v1763
      %v2845 = vpop.f32.mrf.mxu0
      %v2846 = vadd.f32 %v2797, %v2845
      %v2847 = vpop.f32.mrf.mxu0
      %v2848 = vadd.f32 %v2799, %v2847
      %2849 = vmatmul.bf16.gmra.mxu0 %v1764
      %v2850 = vpop.f32.mrf.mxu0
      %v2851 = vadd.f32 %v2802, %v2850
      %v2852 = vpop.f32.mrf.mxu0
      %v2853 = vadd.f32 %v2804, %v2852
      %2854 = vmatmul.bf16.gmra.mxu0 %v1765
      %v2855 = vpop.f32.mrf.mxu0
      %v2856 = vadd.f32 %v2807, %v2855
      %v2857 = vpop.f32.mrf.mxu0
      %v2858 = vadd.f32 %v2809, %v2857
      %2859 = vmatmul.bf16.gmra.mxu0 %v1766
      %v2860 = vpop.f32.mrf.mxu0
      %v2861 = vadd.f32 %v2812, %v2860
      %v2862 = vpop.f32.mrf.mxu0
      %v2863 = vadd.f32 %v2814, %v2862
      %2864 = vmatmul.bf16.gmra.mxu0 %v1767
      %v2865 = vpop.f32.mrf.mxu0
      %v2866 = vadd.f32 %v2817, %v2865
      %v2867 = vpop.f32.mrf.mxu0
      %v2868 = vadd.f32 %v2819, %v2867
      %2869 = vmatmul.bf16.gmra.mxu0 %v1768
      %v2870 = vpop.f32.mrf.mxu0
      %v2871 = vadd.f32 %v2822, %v2870
      %v2872 = vpop.f32.mrf.mxu0
      %v2873 = vadd.f32 %v2824, %v2872
      %2874 = vmatmul.bf16.gmra.mxu0 %v1769
      %v2875 = vpop.f32.mrf.mxu0
      %v2876 = vadd.f32 %v2827, %v2875
      %v2877 = vpop.f32.mrf.mxu0
      %v2878 = vadd.f32 %v2829, %v2877
      %2879 = vdwg.mxu0
      %2880 = vmatpush.bf16.msra.mxu0 %v2757
      %2881 = vmatpush.bf16.msra.mxu0 %v2756
      %2882 = vmatpush.bf16.msra.mxu0 %v2755
      %2883 = vmatpush.bf16.msra.mxu0 %v2754
      %2884 = vmatpush.bf16.msra.mxu0 %v2753
      %2885 = vmatpush.bf16.msra.mxu0 %v2752
      %2886 = vmatpush.bf16.msra.mxu0 %v2751
      %2887 = vmatpush.bf16.msra.mxu0 %v2750
      %2888 = vmatmul.bf16.gmra.mxu0 %v1892
      %v2889 = vpop.f32.mrf.mxu0
      %v2890 = vadd.f32 %v2841, %v2889
      %v2891 = vpop.f32.mrf.mxu0
      %v2892 = vadd.f32 %v2843, %v2891
      %2893 = vmatmul.bf16.gmra.mxu0 %v1893
      %v2894 = vpop.f32.mrf.mxu0
      %v2895 = vadd.f32 %v2846, %v2894
      %v2896 = vpop.f32.mrf.mxu0
      %v2897 = vadd.f32 %v2848, %v2896
      %2898 = vmatmul.bf16.gmra.mxu0 %v1894
      %v2899 = vpop.f32.mrf.mxu0
      %v2900 = vadd.f32 %v2851, %v2899
      %v2901 = vpop.f32.mrf.mxu0
      %v2902 = vadd.f32 %v2853, %v2901
      %2903 = vmatmul.bf16.gmra.mxu0 %v1895
      %v2904 = vpop.f32.mrf.mxu0
      %v2905 = vadd.f32 %v2856, %v2904
      %v2906 = vpop.f32.mrf.mxu0
      %v2907 = vadd.f32 %v2858, %v2906
      %2908 = vmatmul.bf16.gmra.mxu0 %v1896
      %v2909 = vpop.f32.mrf.mxu0
      %v2910 = vadd.f32 %v2861, %v2909
      %v2911 = vpop.f32.mrf.mxu0
      %v2912 = vadd.f32 %v2863, %v2911
      %2913 = vmatmul.bf16.gmra.mxu0 %v1897
      %v2914 = vpop.f32.mrf.mxu0
      %v2915 = vadd.f32 %v2866, %v2914
      %v2916 = vpop.f32.mrf.mxu0
      %v2917 = vadd.f32 %v2868, %v2916
      %2918 = vmatmul.bf16.gmra.mxu0 %v1898
      %v2919 = vpop.f32.mrf.mxu0
      %v2920 = vadd.f32 %v2871, %v2919
      %v2921 = vpop.f32.mrf.mxu0
      %v2922 = vadd.f32 %v2873, %v2921
      %2923 = vmatmul.bf16.gmra.mxu0 %v1899
      %v2924 = vpop.f32.mrf.mxu0
      %v2925 = vadd.f32 %v2876, %v2924
      %v2926 = vpop.f32.mrf.mxu0
      %v2927 = vadd.f32 %v2878, %v2926
      %2928 = vdwg.mxu0
      %v2929 = vadd.f32 %v2550, %v2890
      %v2930 = vadd.f32 %v2552, %v2892
      %v2931 = vadd.f32 %v2555, %v2895
      %v2932 = vadd.f32 %v2557, %v2897
      %v2933 = vadd.f32 %v2560, %v2900
      %v2934 = vadd.f32 %v2562, %v2902
      %v2935 = vadd.f32 %v2565, %v2905
      %v2936 = vadd.f32 %v2567, %v2907
      %v2937 = vadd.f32 %v2570, %v2910
      %v2938 = vadd.f32 %v2572, %v2912
      %v2939 = vadd.f32 %v2575, %v2915
      %v2940 = vadd.f32 %v2577, %v2917
      %v2941 = vadd.f32 %v2580, %v2920
      %v2942 = vadd.f32 %v2582, %v2922
      %v2943 = vadd.f32 %v2585, %v2925
      %v2944 = vadd.f32 %v2587, %v2927
      %v2945 = vmax.f32 %v2929, 0.0
      %v2946 = vmax.f32 %v2930, 0.0
      %v2947 = vmax.f32 %v2931, 0.0
      %v2948 = vmax.f32 %v2932, 0.0
      %v2949 = vmax.f32 %v2933, 0.0
      %v2950 = vmax.f32 %v2934, 0.0
      %v2951 = vmax.f32 %v2935, 0.0
      %v2952 = vmax.f32 %v2936, 0.0
      %v2953 = vmax.f32 %v2937, 0.0
      %v2954 = vmax.f32 %v2938, 0.0
      %v2955 = vmax.f32 %v2939, 0.0
      %v2956 = vmax.f32 %v2940, 0.0
      %v2957 = vmax.f32 %v2941, 0.0
      %v2958 = vmax.f32 %v2942, 0.0
      %v2959 = vmax.f32 %v2943, 0.0
      %v2960 = vmax.f32 %v2944, 0.0
      %v2961 = vpack.c.bf16 %v2945, %v2945
      %v2962 = vpack.c.bf16 %v2946, %v2946
      %v2963 = vpack.c.bf16 %v2947, %v2947
      %v2964 = vpack.c.bf16 %v2948, %v2948
      %v2965 = vpack.c.bf16 %v2949, %v2949
      %v2966 = vpack.c.bf16 %v2950, %v2950
      %v2967 = vpack.c.bf16 %v2951, %v2951
      %v2968 = vpack.c.bf16 %v2952, %v2952
      %v2969 = vpack.c.bf16 %v2953, %v2953
      %v2970 = vpack.c.bf16 %v2954, %v2954
      %v2971 = vpack.c.bf16 %v2955, %v2955
      %v2972 = vpack.c.bf16 %v2956, %v2956
      %v2973 = vpack.c.bf16 %v2957, %v2957
      %v2974 = vpack.c.bf16 %v2958, %v2958
      %v2975 = vpack.c.bf16 %v2959, %v2959
      %v2976 = vpack.c.bf16 %v2960, %v2960
      %2977 = vst [vmem:[%s208] sm:$0xf] %v2961
      %2978 = vst [vmem:[%s208 + $0x4] sm:$0xf] %v2962
      %2979 = vst [vmem:[%s208 + $0x8] sm:$0xf] %v2963
      %2980 = vst [vmem:[%s208 + $0xc] sm:$0xf] %v2964
      %2981 = vst [vmem:[%s208 + $0x10] sm:$0xf] %v2965
      %2982 = vst [vmem:[%s208 + $0x14] sm:$0xf] %v2966
      %2983 = vst [vmem:[%s208 + $0x18] sm:$0xf] %v2967
      %2984 = vst [vmem:[%s208 + $0x1c] sm:$0xf] %v2968
      %2985 = vst [vmem:[%s208 + $0x20] sm:$0xf] %v2969
      %2986 = vst [vmem:[%s208 + $0x24] sm:$0xf] %v2970
      %2987 = vst [vmem:[%s208 + $0x28] sm:$0xf] %v2971
      %2988 = vst [vmem:[%s208 + $0x2c] sm:$0xf] %v2972
      %2989 = vst [vmem:[%s208 + $0x30] sm:$0xf] %v2973
      %2990 = vst [vmem:[%s208 + $0x34] sm:$0xf] %v2974
      %2991 = vst [vmem:[%s208 + $0x38] sm:$0xf] %v2975
      %2992 = vst [vmem:[%s208 + $0x3c] sm:$0xf] %v2976
      %s2993 = smul.u32 8, %s19
      %p2994 = scmp.lt.s32.totalorder %s18, 1
      %s2995 = scalar_select %p2994, %s18, 1
      %p2996 = scmp.lt.s32.totalorder %s2993, 15
      %s2997 = scalar_select %p2996, %s2993, 15
      %s2998 = smul.addr %s2997, 2
      %s2999 = smul.addr %s2995, 32
      %s3000 = sadd.s32 %s2998, %s2999
      %s3001 = smul.addr %s3000, 4
      %s3002 = scalar_lea.vmem %s3, %s3001
      // Predicated region
      $region33: #{up_forward.1} parent=31 // pred_check
        %p3003 = pneg %p116
      $region34: #{up_forward.1} parent=31 // pred_check_branch
        %3005 = sbr.rel (%p3003) target = $region36
      $region35: #{up_forward.1} parent=31 // pred_region
        %s3006 = smul.u32 8, %s19
      $region36: #{up_forward.1} parent=31 // pred_fallthru
        _
    $region32: #{up_forward.1} parent=5 // pred_fallthru
      _
    %p3007 = scmp.le.s32.totalorder 2, %s9
    // Predicated region
    $region37: #{up_forward.1} parent=5 // pred_check
      %p3008 = pneg %p3007
    $region38: #{up_forward.1} parent=5 // pred_check_branch
      %3010 = sbr.rel (%p3008) target = $region40
    $region39: #{up_forward.1} parent=5 // pred_region
      %s3011 = ssub.s32 %s9, 2
      // Predicated region
      $region41: #{up_forward.1} parent=39 // pred_check
        %p3012 = pneg %p122
      $region42: #{up_forward.1} parent=39 // pred_check_branch
        %3014 = sbr.rel (%p3012) target = $region44
      $region43: #{up_forward.1} parent=39 // pred_region
        %s3015 = smul.u32 8, %s21
        %p3016 = scmp.lt.s32.totalorder %s20, 1
        %s3017 = scalar_select %p3016, %s20, 1
        %p3018 = scmp.lt.s32.totalorder %s3015, 15
        %s3019 = scalar_select %p3018, %s3015, 15
        %s3020 = smul.addr %s3019, 2
        %s3021 = smul.addr %s3017, 32
        %s3022 = sadd.s32 %s3020, %s3021
        %s3023 = smul.addr %s3022, 4
        %s3024 = scalar_lea.vmem %s3, %s3023
      $region44: #{up_forward.1} parent=39 // pred_fallthru
        _
    $region40: #{up_forward.1} parent=5 // pred_fallthru
      _
  $region6: #{up_forward.1} parent=0 // loop_footer
    %s13 = sadd.s32 1, %s9
  $region7: #{up_forward.1} parent=0 // loop_footer_branch
    %8 = sbr.rel target = $region3
  $region8: #{up_forward.1} parent=0 // loop_exit
    _

</llo_original>
